<compile_context>
chip_gen: v5e
topology: v5e:2x2
jax: 0.10.0
libtpu: 0.0.40
codegen_flags: <defaults>
</compile_context>

<pallas_src>
import functools

import jax
import jax.numpy as jnp
from jax.experimental import pallas as pl
from jax.experimental.pallas import tpu as pltpu


# ----------------------------- in-kernel helpers -----------------------------

def _layernorm(x, g, b, eps=1e-5):
    mu = jnp.mean(x, axis=-1, keepdims=True)
    xc = x - mu
    var = jnp.mean(xc * xc, axis=-1, keepdims=True)
    return xc * jax.lax.rsqrt(var + eps) * g + b


def _gelu_tanh(x):
    # TODO(synk): open_clip's default nn.GELU is the exact erf form; tanh approx keeps
    # the op on the EUP and differs by ~1e-3.
    c = jnp.float32(0.7978845608028654)  # sqrt(2/pi)
    return 0.5 * x * (1.0 + jnp.tanh(c * (x + 0.044715 * x * x * x)))


def _softmax_lastdim(s):
    s = s - jnp.max(s, axis=-1, keepdims=True)
    p = jnp.exp(s)
    return p * pl.reciprocal(jnp.sum(p, axis=-1, keepdims=True), approx=True)


# ------------------------------- fused kernel ---------------------------------

def _encoder_kernel(patches_ref, patch_w, patch_b, cls_ref, pos_ref,
                    ln_pre_g, ln_pre_b,
                    ln1_g, ln1_b, w_q, b_q, w_k, b_k, w_v, b_v, w_o, b_o,
                    ln2_g, ln2_b, w_fc1, b_fc1, w_fc2, b_fc2,
                    ln_post_g, ln_post_b, proj_ref,
                    out_ref, *, num_heads):
    # One grid step == the full ViT encoder for one image.
    D = patch_w.shape[1]
    H = num_heads
    hd = D // H
    L = w_fc1.shape[0]
    scale = jnp.float32(1.0 / (hd ** 0.5))

    # ---- patch embedding (conv with kernel=stride=patch as a matmul) ----
    patches = patches_ref[0]                                              # (N, P)
    x = jnp.dot(patches, patch_w[...],
                preferred_element_type=jnp.float32) + patch_b[...]        # (N, D)

    # ---- prepend CLS token, add positional embedding, ln_pre ----
    x = jnp.concatenate([cls_ref[...], x], axis=0) + pos_ref[...]         # (T, D)
    x = _layernorm(x, ln_pre_g[...], ln_pre_b[...])

    # ---- residual attention blocks (VMEM/vreg-resident carry) ----
    def layer_body(l, x):
        # attention branch; heads live on a leading batch axis (no lane slicing).
        xn = _layernorm(x, ln1_g[l], ln1_b[l])                            # (T, D)
        xn_h = jnp.broadcast_to(xn[None], (H,) + xn.shape)                # (H, T, D)
        q = jnp.einsum('htd,hdk->htk', xn_h, w_q[l],
                       preferred_element_type=jnp.float32) + b_q[l]       # (H, T, hd)
        k = jnp.einsum('htd,hdk->htk', xn_h, w_k[l],
                       preferred_element_type=jnp.float32) + b_k[l]
        v = jnp.einsum('htd,hdk->htk', xn_h, w_v[l],
                       preferred_element_type=jnp.float32) + b_v[l]
        s = jnp.einsum('htd,hsd->hts', q * scale, k,
                       preferred_element_type=jnp.float32)                # (H, T, T)
        p = _softmax_lastdim(s)
        av = jnp.einsum('hts,hsd->htd', p, v,
                        preferred_element_type=jnp.float32)               # (H, T, hd)
        # out-projection done per head and summed -> no lane concatenation.
        attn = jnp.einsum('htd,hdk->htk', av, w_o[l],
                          preferred_element_type=jnp.float32)             # (H, T, D)
        attn = jnp.sum(attn, axis=0) + b_o[l]                             # (T, D)
        x = x + attn

        # MLP branch.
        xn2 = _layernorm(x, ln2_g[l], ln2_b[l])
        h1 = jnp.dot(xn2, w_fc1[l],
                     preferred_element_type=jnp.float32) + b_fc1[l]       # (T, F)
        h1 = _gelu_tanh(h1)
        h2 = jnp.dot(h1, w_fc2[l],
                     preferred_element_type=jnp.float32) + b_fc2[l]       # (T, D)
        return x + h2

    x = jax.lax.fori_loop(0, L, layer_body, x)

    # ---- ln_post on the CLS token + visual projection (single final store) ----
    x_cls = x[0:1, :]                                                     # (1, D)
    xn = _layernorm(x_cls, ln_post_g[...], ln_post_b[...])
    out_ref[0] = jnp.dot(xn, proj_ref[...], preferred_element_type=jnp.float32)


# ------------------------------ pallas wrapper --------------------------------

def _const_spec(w):
    nd = w.ndim
    return pl.BlockSpec(w.shape, lambda b, _nd=nd: (0,) * _nd)


def encode_image(params, cfg, images):
    # images: NCHW float32, like torch.
    B, C, Hh, Ww = images.shape
    p, D = cfg['patch'], cfg['width']
    gh, gw = Hh // p, Ww // p
    N = gh * gw
    P = C * p * p
    out_dim = params['proj'].shape[1]

    # Unfold non-overlapping patches, ordered (c, ph, pw) to match the
    # Conv2d(weight.reshape(D, C*p*p)) contraction order.  (only remaining glue op)
    patches = images.reshape(B, C, gh, p, gw, p).transpose(0, 2, 4, 1, 3, 5)
    patches = patches.reshape(B, N, P)

    st = params['stacked']
    weights = [params['patch_w'], params['patch_b'], params['cls'], params['pos'],
               params['ln_pre_g'], params['ln_pre_b'],
               st['ln1_g'], st['ln1_b'], st['w_q'], st['b_q'], st['w_k'], st['b_k'],
               st['w_v'], st['b_v'], st['w_o'], st['b_o'],
               st['ln2_g'], st['ln2_b'], st['w_fc1'], st['b_fc1'],
               st['w_fc2'], st['b_fc2'],
               params['ln_post_g'], params['ln_post_b'], params['proj']]

    in_specs = ([pl.BlockSpec((1, N, P), lambda b: (b, 0, 0))]
                + [_const_spec(w) for w in weights])

    out = pl.pallas_call(
        functools.partial(_encoder_kernel, num_heads=cfg['heads']),
        out_shape=jax.ShapeDtypeStruct((B, 1, out_dim), jnp.float32),
        grid=(B,),
        in_specs=in_specs,
        out_specs=pl.BlockSpec((1, 1, out_dim), lambda b: (b, 0, 0)),
        compiler_params=pltpu.CompilerParams(
            dimension_semantics=("parallel",)),   # v7x: shard batch across 2 TCs
    )(patches, *weights)
    return out.reshape(B, out_dim)


# ----------------------------- model construction -----------------------------

def init_params(key, *, in_chans=3, image_size=16, patch=8, width=32,
                heads=2, layers=2, mlp_dim=128, out_dim=16):
    n_patches = (image_size // patch) ** 2
    T = n_patches + 1
    P = in_chans * patch * patch
    hd = width // heads
    s = 0.02
    keys = iter(jax.random.split(key, 12))

    def nrm(shape):
        return jax.random.normal(next(keys), shape, jnp.float32) * s

    params = dict(
        patch_w=nrm((P, width)),                   # Conv2d weight reshaped (C*p*p, D)
        patch_b=jnp.zeros((1, width), jnp.float32),
        cls=nrm((1, width)),
        pos=nrm((T, width)),
        ln_pre_g=jnp.ones((1, width), jnp.float32),
        ln_pre_b=jnp.zeros((1, width), jnp.float32),
        ln_post_g=jnp.ones((1, width), jnp.float32),
        ln_post_b=jnp.zeros((1, width), jnp.float32),
        proj=nrm((width, out_dim)),                # visual projection
        stacked=dict(                              # per-layer weights stacked on axis 0
            ln1_g=jnp.ones((layers, 1, width), jnp.float32),
            ln1_b=jnp.zeros((layers, 1, width), jnp.float32),
            w_q=nrm((layers, heads, width, hd)),   # head-major Q/K/V/O -> no lane slicing
            b_q=jnp.zeros((layers, heads, 1, hd), jnp.float32),
            w_k=nrm((layers, heads, width, hd)),
            b_k=jnp.zeros((layers, heads, 1, hd), jnp.float32),
            w_v=nrm((layers, heads, width, hd)),
            b_v=jnp.zeros((layers, heads, 1, hd), jnp.float32),
            w_o=nrm((layers, heads, hd, width)),
            b_o=jnp.zeros((layers, 1, width), jnp.float32),
            ln2_g=jnp.ones((layers, 1, width), jnp.float32),
            ln2_b=jnp.zeros((layers, 1, width), jnp.float32),
            w_fc1=nrm((layers, width, mlp_dim)),
            b_fc1=jnp.zeros((layers, 1, mlp_dim), jnp.float32),
            w_fc2=nrm((layers, mlp_dim, width)),
            b_fc2=jnp.zeros((layers, 1, width), jnp.float32),
        ),
    )
    cfg = dict(patch=patch, heads=heads, width=width, image_size=image_size)
    return params, cfg


def open_clip_forward(params, cfg, img1, img2=None):
    # Mirrors OpenClipModel.forward exactly (concat -> encode -> split).
    if img2 is not None:
        images = jnp.concatenate([img1, img2], axis=0)
        feats = encode_image(params, cfg, images)
        n1 = img1.shape[0]
        return feats[:n1, :], feats[n1:, :]
    return encode_image(params, cfg, img1)


# ------------------------------------ main ------------------------------------

if __name__ == "__main__":
    key = jax.random.PRNGKey(0)
    k_params, k_img1, k_img2 = jax.random.split(key, 3)

    params, cfg = init_params(k_params, in_chans=3, image_size=16, patch=8,
                              width=32, heads=2, layers=2, mlp_dim=128, out_dim=16)

    # Small NCHW images consistent with an image encoder.
    img1 = jax.random.normal(k_img1, (2, 3, 16, 16), jnp.float32)
    img2 = jax.random.normal(k_img2, (2, 3, 16, 16), jnp.float32)

    forward_pair = jax.jit(lambda prm, a, b: open_clip_forward(prm, cfg, a, b))
    forward_single = jax.jit(lambda prm, a: open_clip_forward(prm, cfg, a))

    f1, f2 = forward_pair(params, img1, img2)
    f_single = forward_single(params, img1)

    jax.block_until_ready((f1, f2, f_single))

    assert f1.shape == (2, 16) and f2.shape == (2, 16) and f_single.shape == (2, 16)
    # TODO(synk): open_clip.create_model / pretrained checkpoint loading is replaced
    # by deterministic synthetic weights (no file I/O by design).
    print("KERNEL_OK")
</pallas_src>

<mosaic_0001>
module attributes {stable_mosaic.version = 11 : i64} {
  func.func @_encoder_kernel(%arg0: i32, %arg1: memref<1x4x192xf32, #tpu.memory_space<vmem>>, %arg2: memref<192x32xf32, #tpu.memory_space<vmem>>, %arg3: memref<1x32xf32, #tpu.memory_space<vmem>>, %arg4: memref<1x32xf32, #tpu.memory_space<vmem>>, %arg5: memref<5x32xf32, #tpu.memory_space<vmem>>, %arg6: memref<1x32xf32, #tpu.memory_space<vmem>>, %arg7: memref<1x32xf32, #tpu.memory_space<vmem>>, %arg8: memref<2x1x32xf32, #tpu.memory_space<vmem>>, %arg9: memref<2x1x32xf32, #tpu.memory_space<vmem>>, %arg10: memref<2x2x32x16xf32, #tpu.memory_space<vmem>>, %arg11: memref<2x2x1x16xf32, #tpu.memory_space<vmem>>, %arg12: memref<2x2x32x16xf32, #tpu.memory_space<vmem>>, %arg13: memref<2x2x1x16xf32, #tpu.memory_space<vmem>>, %arg14: memref<2x2x32x16xf32, #tpu.memory_space<vmem>>, %arg15: memref<2x2x1x16xf32, #tpu.memory_space<vmem>>, %arg16: memref<2x2x16x32xf32, #tpu.memory_space<vmem>>, %arg17: memref<2x1x32xf32, #tpu.memory_space<vmem>>, %arg18: memref<2x1x32xf32, #tpu.memory_space<vmem>>, %arg19: memref<2x1x32xf32, #tpu.memory_space<vmem>>, %arg20: memref<2x32x128xf32, #tpu.memory_space<vmem>>, %arg21: memref<2x1x128xf32, #tpu.memory_space<vmem>>, %arg22: memref<2x128x32xf32, #tpu.memory_space<vmem>>, %arg23: memref<2x1x32xf32, #tpu.memory_space<vmem>>, %arg24: memref<1x32xf32, #tpu.memory_space<vmem>>, %arg25: memref<1x32xf32, #tpu.memory_space<vmem>>, %arg26: memref<32x16xf32, #tpu.memory_space<vmem>>, %arg27: memref<1x1x16xf32, #tpu.memory_space<vmem>>) attributes {dimension_semantics = [#tpu.dimension_semantics<parallel>], iteration_bounds = array<i64: 4>, scalar_prefetch = 0 : i64, scratch_operands = 0 : i64, tpu.core_type = #tpu.core_type<tc>, window_params = [{transform_indices = @transform_0, window_bounds = array<i64: 1, 4, 192>}, {pipeline_mode = #tpu.pipeline_mode<synchronous>, transform_indices = @transform_1, window_bounds = array<i64: 192, 32>}, {pipeline_mode = #tpu.pipeline_mode<synchronous>, transform_indices = @transform_2, window_bounds = array<i64: 1, 32>}, {pipeline_mode = #tpu.pipeline_mode<synchronous>, transform_indices = @transform_3, window_bounds = array<i64: 1, 32>}, {pipeline_mode = #tpu.pipeline_mode<synchronous>, transform_indices = @transform_4, window_bounds = array<i64: 5, 32>}, {pipeline_mode = #tpu.pipeline_mode<synchronous>, transform_indices = @transform_5, window_bounds = array<i64: 1, 32>}, {pipeline_mode = #tpu.pipeline_mode<synchronous>, transform_indices = @transform_6, window_bounds = array<i64: 1, 32>}, {pipeline_mode = #tpu.pipeline_mode<synchronous>, transform_indices = @transform_7, window_bounds = array<i64: 2, 1, 32>}, {pipeline_mode = #tpu.pipeline_mode<synchronous>, transform_indices = @transform_8, window_bounds = array<i64: 2, 1, 32>}, {pipeline_mode = #tpu.pipeline_mode<synchronous>, transform_indices = @transform_9, window_bounds = array<i64: 2, 2, 32, 16>}, {pipeline_mode = #tpu.pipeline_mode<synchronous>, transform_indices = @transform_10, window_bounds = array<i64: 2, 2, 1, 16>}, {pipeline_mode = #tpu.pipeline_mode<synchronous>, transform_indices = @transform_11, window_bounds = array<i64: 2, 2, 32, 16>}, {pipeline_mode = #tpu.pipeline_mode<synchronous>, transform_indices = @transform_12, window_bounds = array<i64: 2, 2, 1, 16>}, {pipeline_mode = #tpu.pipeline_mode<synchronous>, transform_indices = @transform_13, window_bounds = array<i64: 2, 2, 32, 16>}, {pipeline_mode = #tpu.pipeline_mode<synchronous>, transform_indices = @transform_14, window_bounds = array<i64: 2, 2, 1, 16>}, {pipeline_mode = #tpu.pipeline_mode<synchronous>, transform_indices = @transform_15, window_bounds = array<i64: 2, 2, 16, 32>}, {pipeline_mode = #tpu.pipeline_mode<synchronous>, transform_indices = @transform_16, window_bounds = array<i64: 2, 1, 32>}, {pipeline_mode = #tpu.pipeline_mode<synchronous>, transform_indices = @transform_17, window_bounds = array<i64: 2, 1, 32>}, {pipeline_mode = #tpu.pipeline_mode<synchronous>, transform_indices = @transform_18, window_bounds = array<i64: 2, 1, 32>}, {pipeline_mode = #tpu.pipeline_mode<synchronous>, transform_indices = @transform_19, window_bounds = array<i64: 2, 32, 128>}, {pipeline_mode = #tpu.pipeline_mode<synchronous>, transform_indices = @transform_20, window_bounds = array<i64: 2, 1, 128>}, {pipeline_mode = #tpu.pipeline_mode<synchronous>, transform_indices = @transform_21, window_bounds = array<i64: 2, 128, 32>}, {pipeline_mode = #tpu.pipeline_mode<synchronous>, transform_indices = @transform_22, window_bounds = array<i64: 2, 1, 32>}, {pipeline_mode = #tpu.pipeline_mode<synchronous>, transform_indices = @transform_23, window_bounds = array<i64: 1, 32>}, {pipeline_mode = #tpu.pipeline_mode<synchronous>, transform_indices = @transform_24, window_bounds = array<i64: 1, 32>}, {pipeline_mode = #tpu.pipeline_mode<synchronous>, transform_indices = @transform_25, window_bounds = array<i64: 32, 16>}, {transform_indices = @transform_26, window_bounds = array<i64: 1, 1, 16>}]} {
    %c0 = arith.constant 0 : index
    %c0_0 = arith.constant 0 : index
    %c0_1 = arith.constant 0 : index
    %0 = vector.load %arg1[%c0, %c0_0, %c0_1] : memref<1x4x192xf32, #tpu.memory_space<vmem>>, vector<1x4x192xf32>
    %1 = vector.shape_cast %0 : vector<1x4x192xf32> to vector<4x192xf32>
    %c0_2 = arith.constant 0 : index
    %c0_3 = arith.constant 0 : index
    %2 = vector.load %arg2[%c0_2, %c0_3] : memref<192x32xf32, #tpu.memory_space<vmem>>, vector<192x32xf32>
    %cst = arith.constant dense<0.000000e+00> : vector<4x32xf32>
    %3 = tpu.matmul %1, %2, %cst {dimension_numbers = #tpu.dot_dimension_numbers<[1], [0], [0], [1], [0, 0, 1, 1], [], []>} : vector<4x192xf32>, vector<192x32xf32>, vector<4x32xf32> -> vector<4x32xf32>
    %c0_4 = arith.constant 0 : index
    %c0_5 = arith.constant 0 : index
    %4 = vector.load %arg3[%c0_4, %c0_5] : memref<1x32xf32, #tpu.memory_space<vmem>>, vector<1x32xf32>
    %5 = vector.broadcast %4 : vector<1x32xf32> to vector<4x32xf32>
    %6 = arith.addf %3, %5 : vector<4x32xf32>
    %c0_6 = arith.constant 0 : index
    %c0_7 = arith.constant 0 : index
    %7 = vector.load %arg4[%c0_6, %c0_7] : memref<1x32xf32, #tpu.memory_space<vmem>>, vector<1x32xf32>
    %8 = tpu.concatenate %7, %6 in 0 : vector<1x32xf32>, vector<4x32xf32> -> vector<5x32xf32>
    %c0_8 = arith.constant 0 : index
    %c0_9 = arith.constant 0 : index
    %9 = vector.load %arg5[%c0_8, %c0_9] : memref<5x32xf32, #tpu.memory_space<vmem>>, vector<5x32xf32>
    %10 = arith.addf %8, %9 : vector<5x32xf32>
    %c0_10 = arith.constant 0 : index
    %c0_11 = arith.constant 0 : index
    %11 = vector.load %arg6[%c0_10, %c0_11] : memref<1x32xf32, #tpu.memory_space<vmem>>, vector<1x32xf32>
    %c0_12 = arith.constant 0 : index
    %c0_13 = arith.constant 0 : index
    %12 = vector.load %arg7[%c0_12, %c0_13] : memref<1x32xf32, #tpu.memory_space<vmem>>, vector<1x32xf32>
    %cst_14 = arith.constant dense<0.000000e+00> : vector<5xf32>
    %13 = vector.multi_reduction <add>, %10, %cst_14 [1] : vector<5x32xf32> to vector<5xf32>
    %14 = vector.shape_cast %13 : vector<5xf32> to vector<5x1xf32>
    %cst_15 = arith.constant 3.200000e+01 : f32
    %15 = vector.broadcast %cst_15 : f32 to vector<5x1xf32>
    %16 = arith.divf %14, %15 : vector<5x1xf32>
    %17 = vector.broadcast %16 : vector<5x1xf32> to vector<5x32xf32>
    %18 = arith.subf %10, %17 : vector<5x32xf32>
    %19 = arith.mulf %18, %18 : vector<5x32xf32>
    %cst_16 = arith.constant dense<0.000000e+00> : vector<5xf32>
    %20 = vector.multi_reduction <add>, %19, %cst_16 [1] : vector<5x32xf32> to vector<5xf32>
    %21 = vector.shape_cast %20 : vector<5xf32> to vector<5x1xf32>
    %cst_17 = arith.constant 3.200000e+01 : f32
    %22 = vector.broadcast %cst_17 : f32 to vector<5x1xf32>
    %23 = arith.divf %21, %22 : vector<5x1xf32>
    %cst_18 = arith.constant 9.99999974E-6 : f32
    %24 = vector.broadcast %cst_18 : f32 to vector<5x1xf32>
    %25 = arith.addf %23, %24 : vector<5x1xf32>
    %26 = math.rsqrt %25 : vector<5x1xf32>
    %27 = vector.broadcast %26 : vector<5x1xf32> to vector<5x32xf32>
    %28 = arith.mulf %18, %27 : vector<5x32xf32>
    %29 = vector.broadcast %11 : vector<1x32xf32> to vector<5x32xf32>
    %30 = arith.mulf %28, %29 : vector<5x32xf32>
    %31 = vector.broadcast %12 : vector<1x32xf32> to vector<5x32xf32>
    %32 = arith.addf %30, %31 : vector<5x32xf32>
    %cst_19 = arith.constant 2.500000e-01 : f32
    %c0_i32 = arith.constant 0 : i32
    %c2_i32 = arith.constant 2 : i32
    %33 = arith.addi %c0_i32, %c2_i32 : i32
    %c1_i32 = arith.constant 1 : i32
    %34 = scf.for %arg28 = %c0_i32 to %33 step %c1_i32 iter_args(%arg29 = %32) -> (vector<5x32xf32>)  : i32 {
      %61 = arith.index_cast %arg28 : i32 to index
      %c0_36 = arith.constant 0 : index
      %c0_37 = arith.constant 0 : index
      %62 = vector.load %arg8[%61, %c0_36, %c0_37] : memref<2x1x32xf32, #tpu.memory_space<vmem>>, vector<1x1x32xf32>
      %63 = vector.shape_cast %62 : vector<1x1x32xf32> to vector<1x32xf32>
      %64 = arith.index_cast %arg28 : i32 to index
      %c0_38 = arith.constant 0 : index
      %c0_39 = arith.constant 0 : index
      %65 = vector.load %arg9[%64, %c0_38, %c0_39] : memref<2x1x32xf32, #tpu.memory_space<vmem>>, vector<1x1x32xf32>
      %66 = vector.shape_cast %65 : vector<1x1x32xf32> to vector<1x32xf32>
      %cst_40 = arith.constant dense<0.000000e+00> : vector<5xf32>
      %67 = vector.multi_reduction <add>, %arg29, %cst_40 [1] : vector<5x32xf32> to vector<5xf32>
      %68 = vector.shape_cast %67 : vector<5xf32> to vector<5x1xf32>
      %cst_41 = arith.constant 3.200000e+01 : f32
      %69 = vector.broadcast %cst_41 : f32 to vector<5x1xf32>
      %70 = arith.divf %68, %69 : vector<5x1xf32>
      %71 = vector.broadcast %70 : vector<5x1xf32> to vector<5x32xf32>
      %72 = arith.subf %arg29, %71 : vector<5x32xf32>
      %73 = arith.mulf %72, %72 : vector<5x32xf32>
      %cst_42 = arith.constant dense<0.000000e+00> : vector<5xf32>
      %74 = vector.multi_reduction <add>, %73, %cst_42 [1] : vector<5x32xf32> to vector<5xf32>
      %75 = vector.shape_cast %74 : vector<5xf32> to vector<5x1xf32>
      %cst_43 = arith.constant 3.200000e+01 : f32
      %76 = vector.broadcast %cst_43 : f32 to vector<5x1xf32>
      %77 = arith.divf %75, %76 : vector<5x1xf32>
      %cst_44 = arith.constant 9.99999974E-6 : f32
      %78 = vector.broadcast %cst_44 : f32 to vector<5x1xf32>
      %79 = arith.addf %77, %78 : vector<5x1xf32>
      %80 = math.rsqrt %79 : vector<5x1xf32>
      %81 = vector.broadcast %80 : vector<5x1xf32> to vector<5x32xf32>
      %82 = arith.mulf %72, %81 : vector<5x32xf32>
      %83 = vector.broadcast %63 : vector<1x32xf32> to vector<5x32xf32>
      %84 = arith.mulf %82, %83 : vector<5x32xf32>
      %85 = vector.broadcast %66 : vector<1x32xf32> to vector<5x32xf32>
      %86 = arith.addf %84, %85 : vector<5x32xf32>
      %87 = vector.shape_cast %86 : vector<5x32xf32> to vector<1x5x32xf32>
      %88 = vector.shape_cast %87 : vector<1x5x32xf32> to vector<1x5x32xf32>
      %89 = vector.broadcast %88 : vector<1x5x32xf32> to vector<2x5x32xf32>
      %90 = arith.index_cast %arg28 : i32 to index
      %c0_45 = arith.constant 0 : index
      %c0_46 = arith.constant 0 : index
      %c0_47 = arith.constant 0 : index
      %91 = vector.load %arg10[%90, %c0_45, %c0_46, %c0_47] : memref<2x2x32x16xf32, #tpu.memory_space<vmem>>, vector<1x2x32x16xf32>
      %92 = vector.shape_cast %91 : vector<1x2x32x16xf32> to vector<2x32x16xf32>
      "tpu.trace_start"() <{level = 10 : i32, message = "htd,hdk->htk"}> : () -> ()
      %cst_48 = arith.constant dense<0.000000e+00> : vector<2x5x16xf32>
      %93 = tpu.matmul %89, %92, %cst_48 {dimension_numbers = #tpu.dot_dimension_numbers<[2], [1], [1], [2], [0, 0, 0, 1, 1, 2], [0], [0]>} : vector<2x5x32xf32>, vector<2x32x16xf32>, vector<2x5x16xf32> -> vector<2x5x16xf32>
      "tpu.trace_stop"() : () -> ()
      %94 = arith.index_cast %arg28 : i32 to index
      %c0_49 = arith.constant 0 : index
      %c0_50 = arith.constant 0 : index
      %c0_51 = arith.constant 0 : index
      %95 = vector.load %arg11[%94, %c0_49, %c0_50, %c0_51] : memref<2x2x1x16xf32, #tpu.memory_space<vmem>>, vector<1x2x1x16xf32>
      %96 = vector.shape_cast %95 : vector<1x2x1x16xf32> to vector<2x1x16xf32>
      %97 = vector.broadcast %96 : vector<2x1x16xf32> to vector<2x5x16xf32>
      %98 = arith.addf %93, %97 : vector<2x5x16xf32>
      %99 = arith.index_cast %arg28 : i32 to index
      %c0_52 = arith.constant 0 : index
      %c0_53 = arith.constant 0 : index
      %c0_54 = arith.constant 0 : index
      %100 = vector.load %arg12[%99, %c0_52, %c0_53, %c0_54] : memref<2x2x32x16xf32, #tpu.memory_space<vmem>>, vector<1x2x32x16xf32>
      %101 = vector.shape_cast %100 : vector<1x2x32x16xf32> to vector<2x32x16xf32>
      "tpu.trace_start"() <{level = 10 : i32, message = "htd,hdk->htk"}> : () -> ()
      %cst_55 = arith.constant dense<0.000000e+00> : vector<2x5x16xf32>
      %102 = tpu.matmul %89, %101, %cst_55 {dimension_numbers = #tpu.dot_dimension_numbers<[2], [1], [1], [2], [0, 0, 0, 1, 1, 2], [0], [0]>} : vector<2x5x32xf32>, vector<2x32x16xf32>, vector<2x5x16xf32> -> vector<2x5x16xf32>
      "tpu.trace_stop"() : () -> ()
      %103 = arith.index_cast %arg28 : i32 to index
      %c0_56 = arith.constant 0 : index
      %c0_57 = arith.constant 0 : index
      %c0_58 = arith.constant 0 : index
      %104 = vector.load %arg13[%103, %c0_56, %c0_57, %c0_58] : memref<2x2x1x16xf32, #tpu.memory_space<vmem>>, vector<1x2x1x16xf32>
      %105 = vector.shape_cast %104 : vector<1x2x1x16xf32> to vector<2x1x16xf32>
      %106 = vector.broadcast %105 : vector<2x1x16xf32> to vector<2x5x16xf32>
      %107 = arith.addf %102, %106 : vector<2x5x16xf32>
      %108 = arith.index_cast %arg28 : i32 to index
      %c0_59 = arith.constant 0 : index
      %c0_60 = arith.constant 0 : index
      %c0_61 = arith.constant 0 : index
      %109 = vector.load %arg14[%108, %c0_59, %c0_60, %c0_61] : memref<2x2x32x16xf32, #tpu.memory_space<vmem>>, vector<1x2x32x16xf32>
      %110 = vector.shape_cast %109 : vector<1x2x32x16xf32> to vector<2x32x16xf32>
      "tpu.trace_start"() <{level = 10 : i32, message = "htd,hdk->htk"}> : () -> ()
      %cst_62 = arith.constant dense<0.000000e+00> : vector<2x5x16xf32>
      %111 = tpu.matmul %89, %110, %cst_62 {dimension_numbers = #tpu.dot_dimension_numbers<[2], [1], [1], [2], [0, 0, 0, 1, 1, 2], [0], [0]>} : vector<2x5x32xf32>, vector<2x32x16xf32>, vector<2x5x16xf32> -> vector<2x5x16xf32>
      "tpu.trace_stop"() : () -> ()
      %112 = arith.index_cast %arg28 : i32 to index
      %c0_63 = arith.constant 0 : index
      %c0_64 = arith.constant 0 : index
      %c0_65 = arith.constant 0 : index
      %113 = vector.load %arg15[%112, %c0_63, %c0_64, %c0_65] : memref<2x2x1x16xf32, #tpu.memory_space<vmem>>, vector<1x2x1x16xf32>
      %114 = vector.shape_cast %113 : vector<1x2x1x16xf32> to vector<2x1x16xf32>
      %115 = vector.broadcast %114 : vector<2x1x16xf32> to vector<2x5x16xf32>
      %116 = arith.addf %111, %115 : vector<2x5x16xf32>
      %117 = vector.broadcast %cst_19 : f32 to vector<2x5x16xf32>
      %118 = arith.mulf %98, %117 : vector<2x5x16xf32>
      "tpu.trace_start"() <{level = 10 : i32, message = "htd,hsd->hts"}> : () -> ()
      %cst_66 = arith.constant dense<0.000000e+00> : vector<2x5x5xf32>
      %119 = tpu.matmul %118, %107, %cst_66 {dimension_numbers = #tpu.dot_dimension_numbers<[2], [2], [1], [1], [0, 0, 0, 1, 1, 1], [0], [0]>} : vector<2x5x16xf32>, vector<2x5x16xf32>, vector<2x5x5xf32> -> vector<2x5x5xf32>
      "tpu.trace_stop"() : () -> ()
      %cst_67 = arith.constant dense<0xFF800000> : vector<2x5xf32>
      %120 = vector.multi_reduction <maximumf>, %119, %cst_67 [2] : vector<2x5x5xf32> to vector<2x5xf32>
      %121 = vector.shape_cast %120 : vector<2x5xf32> to vector<2x5x1xf32>
      %122 = vector.broadcast %121 : vector<2x5x1xf32> to vector<2x5x5xf32>
      %123 = arith.subf %119, %122 : vector<2x5x5xf32>
      %124 = math.exp %123 : vector<2x5x5xf32>
      %cst_68 = arith.constant dense<0.000000e+00> : vector<2x5xf32>
      %125 = vector.multi_reduction <add>, %124, %cst_68 [2] : vector<2x5x5xf32> to vector<2x5xf32>
      %126 = vector.shape_cast %125 : vector<2x5xf32> to vector<2x5x1xf32>
      %127 = tpu.reciprocal %126 {approx = true} : vector<2x5x1xf32> -> vector<2x5x1xf32>
      %128 = vector.broadcast %127 : vector<2x5x1xf32> to vector<2x5x5xf32>
      %129 = arith.mulf %124, %128 : vector<2x5x5xf32>
      "tpu.trace_start"() <{level = 10 : i32, message = "hts,hsd->htd"}> : () -> ()
      %cst_69 = arith.constant dense<0.000000e+00> : vector<2x5x16xf32>
      %130 = tpu.matmul %129, %116, %cst_69 {dimension_numbers = #tpu.dot_dimension_numbers<[2], [1], [1], [2], [0, 0, 0, 1, 1, 2], [0], [0]>} : vector<2x5x5xf32>, vector<2x5x16xf32>, vector<2x5x16xf32> -> vector<2x5x16xf32>
      "tpu.trace_stop"() : () -> ()
      %131 = arith.index_cast %arg28 : i32 to index
      %c0_70 = arith.constant 0 : index
      %c0_71 = arith.constant 0 : index
      %c0_72 = arith.constant 0 : index
      %132 = vector.load %arg16[%131, %c0_70, %c0_71, %c0_72] : memref<2x2x16x32xf32, #tpu.memory_space<vmem>>, vector<1x2x16x32xf32>
      %133 = vector.shape_cast %132 : vector<1x2x16x32xf32> to vector<2x16x32xf32>
      "tpu.trace_start"() <{level = 10 : i32, message = "htd,hdk->htk"}> : () -> ()
      %cst_73 = arith.constant dense<0.000000e+00> : vector<2x5x32xf32>
      %134 = tpu.matmul %130, %133, %cst_73 {dimension_numbers = #tpu.dot_dimension_numbers<[2], [1], [1], [2], [0, 0, 0, 1, 1, 2], [0], [0]>} : vector<2x5x16xf32>, vector<2x16x32xf32>, vector<2x5x32xf32> -> vector<2x5x32xf32>
      "tpu.trace_stop"() : () -> ()
      %cst_74 = arith.constant dense<0.000000e+00> : vector<5x32xf32>
      %135 = vector.multi_reduction <add>, %134, %cst_74 [0] : vector<2x5x32xf32> to vector<5x32xf32>
      %136 = arith.index_cast %arg28 : i32 to index
      %c0_75 = arith.constant 0 : index
      %c0_76 = arith.constant 0 : index
      %137 = vector.load %arg17[%136, %c0_75, %c0_76] : memref<2x1x32xf32, #tpu.memory_space<vmem>>, vector<1x1x32xf32>
      %138 = vector.shape_cast %137 : vector<1x1x32xf32> to vector<1x32xf32>
      %139 = vector.broadcast %138 : vector<1x32xf32> to vector<5x32xf32>
      %140 = arith.addf %135, %139 : vector<5x32xf32>
      %141 = arith.addf %arg29, %140 : vector<5x32xf32>
      %142 = arith.index_cast %arg28 : i32 to index
      %c0_77 = arith.constant 0 : index
      %c0_78 = arith.constant 0 : index
      %143 = vector.load %arg18[%142, %c0_77, %c0_78] : memref<2x1x32xf32, #tpu.memory_space<vmem>>, vector<1x1x32xf32>
      %144 = vector.shape_cast %143 : vector<1x1x32xf32> to vector<1x32xf32>
      %145 = arith.index_cast %arg28 : i32 to index
      %c0_79 = arith.constant 0 : index
      %c0_80 = arith.constant 0 : index
      %146 = vector.load %arg19[%145, %c0_79, %c0_80] : memref<2x1x32xf32, #tpu.memory_space<vmem>>, vector<1x1x32xf32>
      %147 = vector.shape_cast %146 : vector<1x1x32xf32> to vector<1x32xf32>
      %cst_81 = arith.constant dense<0.000000e+00> : vector<5xf32>
      %148 = vector.multi_reduction <add>, %141, %cst_81 [1] : vector<5x32xf32> to vector<5xf32>
      %149 = vector.shape_cast %148 : vector<5xf32> to vector<5x1xf32>
      %cst_82 = arith.constant 3.200000e+01 : f32
      %150 = vector.broadcast %cst_82 : f32 to vector<5x1xf32>
      %151 = arith.divf %149, %150 : vector<5x1xf32>
      %152 = vector.broadcast %151 : vector<5x1xf32> to vector<5x32xf32>
      %153 = arith.subf %141, %152 : vector<5x32xf32>
      %154 = arith.mulf %153, %153 : vector<5x32xf32>
      %cst_83 = arith.constant dense<0.000000e+00> : vector<5xf32>
      %155 = vector.multi_reduction <add>, %154, %cst_83 [1] : vector<5x32xf32> to vector<5xf32>
      %156 = vector.shape_cast %155 : vector<5xf32> to vector<5x1xf32>
      %cst_84 = arith.constant 3.200000e+01 : f32
      %157 = vector.broadcast %cst_84 : f32 to vector<5x1xf32>
      %158 = arith.divf %156, %157 : vector<5x1xf32>
      %cst_85 = arith.constant 9.99999974E-6 : f32
      %159 = vector.broadcast %cst_85 : f32 to vector<5x1xf32>
      %160 = arith.addf %158, %159 : vector<5x1xf32>
      %161 = math.rsqrt %160 : vector<5x1xf32>
      %162 = vector.broadcast %161 : vector<5x1xf32> to vector<5x32xf32>
      %163 = arith.mulf %153, %162 : vector<5x32xf32>
      %164 = vector.broadcast %144 : vector<1x32xf32> to vector<5x32xf32>
      %165 = arith.mulf %163, %164 : vector<5x32xf32>
      %166 = vector.broadcast %147 : vector<1x32xf32> to vector<5x32xf32>
      %167 = arith.addf %165, %166 : vector<5x32xf32>
      %168 = arith.index_cast %arg28 : i32 to index
      %c0_86 = arith.constant 0 : index
      %c0_87 = arith.constant 0 : index
      %169 = vector.load %arg20[%168, %c0_86, %c0_87] : memref<2x32x128xf32, #tpu.memory_space<vmem>>, vector<1x32x128xf32>
      %170 = vector.shape_cast %169 : vector<1x32x128xf32> to vector<32x128xf32>
      %cst_88 = arith.constant dense<0.000000e+00> : vector<5x128xf32>
      %171 = tpu.matmul %167, %170, %cst_88 {dimension_numbers = #tpu.dot_dimension_numbers<[1], [0], [0], [1], [0, 0, 1, 1], [], []>} : vector<5x32xf32>, vector<32x128xf32>, vector<5x128xf32> -> vector<5x128xf32>
      %172 = arith.index_cast %arg28 : i32 to index
      %c0_89 = arith.constant 0 : index
      %c0_90 = arith.constant 0 : index
      %173 = vector.load %arg21[%172, %c0_89, %c0_90] : memref<2x1x128xf32, #tpu.memory_space<vmem>>, vector<1x1x128xf32>
      %174 = vector.shape_cast %173 : vector<1x1x128xf32> to vector<1x128xf32>
      %175 = vector.broadcast %174 : vector<1x128xf32> to vector<5x128xf32>
      %176 = arith.addf %171, %175 : vector<5x128xf32>
      %cst_91 = arith.constant 5.000000e-01 : f32
      %177 = vector.broadcast %cst_91 : f32 to vector<5x128xf32>
      %178 = arith.mulf %177, %176 : vector<5x128xf32>
      %cst_92 = arith.constant 4.471500e-02 : f32
      %179 = vector.broadcast %cst_92 : f32 to vector<5x128xf32>
      %180 = arith.mulf %179, %176 : vector<5x128xf32>
      %181 = arith.mulf %180, %176 : vector<5x128xf32>
      %182 = arith.mulf %181, %176 : vector<5x128xf32>
      %183 = arith.addf %176, %182 : vector<5x128xf32>
      %cst_93 = arith.constant 0.797884583 : f32
      %184 = vector.broadcast %cst_93 : f32 to vector<5x128xf32>
      %185 = arith.mulf %184, %183 : vector<5x128xf32>
      %186 = math.tanh %185 : vector<5x128xf32>
      %cst_94 = arith.constant 1.000000e+00 : f32
      %187 = vector.broadcast %cst_94 : f32 to vector<5x128xf32>
      %188 = arith.addf %187, %186 : vector<5x128xf32>
      %189 = arith.mulf %178, %188 : vector<5x128xf32>
      %190 = arith.index_cast %arg28 : i32 to index
      %c0_95 = arith.constant 0 : index
      %c0_96 = arith.constant 0 : index
      %191 = vector.load %arg22[%190, %c0_95, %c0_96] : memref<2x128x32xf32, #tpu.memory_space<vmem>>, vector<1x128x32xf32>
      %192 = vector.shape_cast %191 : vector<1x128x32xf32> to vector<128x32xf32>
      %cst_97 = arith.constant dense<0.000000e+00> : vector<5x32xf32>
      %193 = tpu.matmul %189, %192, %cst_97 {dimension_numbers = #tpu.dot_dimension_numbers<[1], [0], [0], [1], [0, 0, 1, 1], [], []>} : vector<5x128xf32>, vector<128x32xf32>, vector<5x32xf32> -> vector<5x32xf32>
      %194 = arith.index_cast %arg28 : i32 to index
      %c0_98 = arith.constant 0 : index
      %c0_99 = arith.constant 0 : index
      %195 = vector.load %arg23[%194, %c0_98, %c0_99] : memref<2x1x32xf32, #tpu.memory_space<vmem>>, vector<1x1x32xf32>
      %196 = vector.shape_cast %195 : vector<1x1x32xf32> to vector<1x32xf32>
      %197 = vector.broadcast %196 : vector<1x32xf32> to vector<5x32xf32>
      %198 = arith.addf %193, %197 : vector<5x32xf32>
      %199 = arith.addf %141, %198 : vector<5x32xf32>
      scf.yield %199 : vector<5x32xf32>
    }
    %c2_i32_20 = arith.constant 2 : i32
    %35 = vector.extract_strided_slice %34 {offsets = [0, 0], sizes = [1, 32], strides = [1, 1]} : vector<5x32xf32> to vector<1x32xf32>
    %c0_21 = arith.constant 0 : index
    %c0_22 = arith.constant 0 : index
    %36 = vector.load %arg24[%c0_21, %c0_22] : memref<1x32xf32, #tpu.memory_space<vmem>>, vector<1x32xf32>
    %c0_23 = arith.constant 0 : index
    %c0_24 = arith.constant 0 : index
    %37 = vector.load %arg25[%c0_23, %c0_24] : memref<1x32xf32, #tpu.memory_space<vmem>>, vector<1x32xf32>
    %cst_25 = arith.constant dense<0.000000e+00> : vector<1xf32>
    %38 = vector.multi_reduction <add>, %35, %cst_25 [1] : vector<1x32xf32> to vector<1xf32>
    %39 = vector.shape_cast %38 : vector<1xf32> to vector<1x1xf32>
    %cst_26 = arith.constant 3.200000e+01 : f32
    %40 = vector.broadcast %cst_26 : f32 to vector<1x1xf32>
    %41 = arith.divf %39, %40 : vector<1x1xf32>
    %42 = vector.broadcast %41 : vector<1x1xf32> to vector<1x32xf32>
    %43 = arith.subf %35, %42 : vector<1x32xf32>
    %44 = arith.mulf %43, %43 : vector<1x32xf32>
    %cst_27 = arith.constant dense<0.000000e+00> : vector<1xf32>
    %45 = vector.multi_reduction <add>, %44, %cst_27 [1] : vector<1x32xf32> to vector<1xf32>
    %46 = vector.shape_cast %45 : vector<1xf32> to vector<1x1xf32>
    %cst_28 = arith.constant 3.200000e+01 : f32
    %47 = vector.broadcast %cst_28 : f32 to vector<1x1xf32>
    %48 = arith.divf %46, %47 : vector<1x1xf32>
    %cst_29 = arith.constant 9.99999974E-6 : f32
    %49 = vector.broadcast %cst_29 : f32 to vector<1x1xf32>
    %50 = arith.addf %48, %49 : vector<1x1xf32>
    %51 = math.rsqrt %50 : vector<1x1xf32>
    %52 = vector.broadcast %51 : vector<1x1xf32> to vector<1x32xf32>
    %53 = arith.mulf %43, %52 : vector<1x32xf32>
    %54 = arith.mulf %53, %36 : vector<1x32xf32>
    %55 = arith.addf %54, %37 : vector<1x32xf32>
    %c0_30 = arith.constant 0 : index
    %c0_31 = arith.constant 0 : index
    %56 = vector.load %arg26[%c0_30, %c0_31] : memref<32x16xf32, #tpu.memory_space<vmem>>, vector<32x16xf32>
    %cst_32 = arith.constant dense<0.000000e+00> : vector<1x16xf32>
    %57 = tpu.matmul %55, %56, %cst_32 {dimension_numbers = #tpu.dot_dimension_numbers<[1], [0], [0], [1], [0, 0, 1, 1], [], []>} : vector<1x32xf32>, vector<32x16xf32>, vector<1x16xf32> -> vector<1x16xf32>
    %c0_33 = arith.constant 0 : index
    %c0_34 = arith.constant 0 : index
    %c0_35 = arith.constant 0 : index
    %58 = vector.load %arg27[%c0_33, %c0_34, %c0_35] : memref<1x1x16xf32, #tpu.memory_space<vmem>>, vector<1x1x16xf32>
    %59 = vector.shape_cast %58 : vector<1x1x16xf32> to vector<1x16xf32>
    %60 = vector.shape_cast %57 : vector<1x16xf32> to vector<1x1x16xf32>
    tpu.vector_store %arg27[%c0_33, %c0_34, %c0_35], %60 {strides = array<i32>} : memref<1x1x16xf32, #tpu.memory_space<vmem>>, vector<1x1x16xf32>,
    return
  }
  func.func @transform_0(%arg0: i32) -> (i32, i32, i32) {
    %c0_i32 = arith.constant 0 : i32
    %c0_i32_0 = arith.constant 0 : i32
    %c0_i32_1 = arith.constant 0 : i32
    return %arg0, %c0_i32, %c0_i32_0 : i32, i32, i32
  }
  func.func @transform_1(%arg0: i32) -> (i32, i32) {
    %c0_i32 = arith.constant 0 : i32
    %c0_i32_0 = arith.constant 0 : i32
    %c0_i32_1 = arith.constant 0 : i32
    return %c0_i32, %c0_i32_0 : i32, i32
  }
  func.func @transform_2(%arg0: i32) -> (i32, i32) {
    %c0_i32 = arith.constant 0 : i32
    %c0_i32_0 = arith.constant 0 : i32
    %c0_i32_1 = arith.constant 0 : i32
    return %c0_i32, %c0_i32_0 : i32, i32
  }
  func.func @transform_3(%arg0: i32) -> (i32, i32) {
    %c0_i32 = arith.constant 0 : i32
    %c0_i32_0 = arith.constant 0 : i32
    %c0_i32_1 = arith.constant 0 : i32
    return %c0_i32, %c0_i32_0 : i32, i32
  }
  func.func @transform_4(%arg0: i32) -> (i32, i32) {
    %c0_i32 = arith.constant 0 : i32
    %c0_i32_0 = arith.constant 0 : i32
    %c0_i32_1 = arith.constant 0 : i32
    return %c0_i32, %c0_i32_0 : i32, i32
  }
  func.func @transform_5(%arg0: i32) -> (i32, i32) {
    %c0_i32 = arith.constant 0 : i32
    %c0_i32_0 = arith.constant 0 : i32
    %c0_i32_1 = arith.constant 0 : i32
    return %c0_i32, %c0_i32_0 : i32, i32
  }
  func.func @transform_6(%arg0: i32) -> (i32, i32) {
    %c0_i32 = arith.constant 0 : i32
    %c0_i32_0 = arith.constant 0 : i32
    %c0_i32_1 = arith.constant 0 : i32
    return %c0_i32, %c0_i32_0 : i32, i32
  }
  func.func @transform_7(%arg0: i32) -> (i32, i32, i32) {
    %c0_i32 = arith.constant 0 : i32
    %c0_i32_0 = arith.constant 0 : i32
    %c0_i32_1 = arith.constant 0 : i32
    %c0_i32_2 = arith.constant 0 : i32
    return %c0_i32, %c0_i32_0, %c0_i32_1 : i32, i32, i32
  }
  func.func @transform_8(%arg0: i32) -> (i32, i32, i32) {
    %c0_i32 = arith.constant 0 : i32
    %c0_i32_0 = arith.constant 0 : i32
    %c0_i32_1 = arith.constant 0 : i32
    %c0_i32_2 = arith.constant 0 : i32
    return %c0_i32, %c0_i32_0, %c0_i32_1 : i32, i32, i32
  }
  func.func @transform_9(%arg0: i32) -> (i32, i32, i32, i32) {
    %c0_i32 = arith.constant 0 : i32
    %c0_i32_0 = arith.constant 0 : i32
    %c0_i32_1 = arith.constant 0 : i32
    %c0_i32_2 = arith.constant 0 : i32
    %c0_i32_3 = arith.constant 0 : i32
    return %c0_i32, %c0_i32_0, %c0_i32_1, %c0_i32_2 : i32, i32, i32, i32
  }
  func.func @transform_10(%arg0: i32) -> (i32, i32, i32, i32) {
    %c0_i32 = arith.constant 0 : i32
    %c0_i32_0 = arith.constant 0 : i32
    %c0_i32_1 = arith.constant 0 : i32
    %c0_i32_2 = arith.constant 0 : i32
    %c0_i32_3 = arith.constant 0 : i32
    return %c0_i32, %c0_i32_0, %c0_i32_1, %c0_i32_2 : i32, i32, i32, i32
  }
  func.func @transform_11(%arg0: i32) -> (i32, i32, i32, i32) {
    %c0_i32 = arith.constant 0 : i32
    %c0_i32_0 = arith.constant 0 : i32
    %c0_i32_1 = arith.constant 0 : i32
    %c0_i32_2 = arith.constant 0 : i32
    %c0_i32_3 = arith.constant 0 : i32
    return %c0_i32, %c0_i32_0, %c0_i32_1, %c0_i32_2 : i32, i32, i32, i32
  }
  func.func @transform_12(%arg0: i32) -> (i32, i32, i32, i32) {
    %c0_i32 = arith.constant 0 : i32
    %c0_i32_0 = arith.constant 0 : i32
    %c0_i32_1 = arith.constant 0 : i32
    %c0_i32_2 = arith.constant 0 : i32
    %c0_i32_3 = arith.constant 0 : i32
    return %c0_i32, %c0_i32_0, %c0_i32_1, %c0_i32_2 : i32, i32, i32, i32
  }
  func.func @transform_13(%arg0: i32) -> (i32, i32, i32, i32) {
    %c0_i32 = arith.constant 0 : i32
    %c0_i32_0 = arith.constant 0 : i32
    %c0_i32_1 = arith.constant 0 : i32
    %c0_i32_2 = arith.constant 0 : i32
    %c0_i32_3 = arith.constant 0 : i32
    return %c0_i32, %c0_i32_0, %c0_i32_1, %c0_i32_2 : i32, i32, i32, i32
  }
  func.func @transform_14(%arg0: i32) -> (i32, i32, i32, i32) {
    %c0_i32 = arith.constant 0 : i32
    %c0_i32_0 = arith.constant 0 : i32
    %c0_i32_1 = arith.constant 0 : i32
    %c0_i32_2 = arith.constant 0 : i32
    %c0_i32_3 = arith.constant 0 : i32
    return %c0_i32, %c0_i32_0, %c0_i32_1, %c0_i32_2 : i32, i32, i32, i32
  }
  func.func @transform_15(%arg0: i32) -> (i32, i32, i32, i32) {
    %c0_i32 = arith.constant 0 : i32
    %c0_i32_0 = arith.constant 0 : i32
    %c0_i32_1 = arith.constant 0 : i32
    %c0_i32_2 = arith.constant 0 : i32
    %c0_i32_3 = arith.constant 0 : i32
    return %c0_i32, %c0_i32_0, %c0_i32_1, %c0_i32_2 : i32, i32, i32, i32
  }
  func.func @transform_16(%arg0: i32) -> (i32, i32, i32) {
    %c0_i32 = arith.constant 0 : i32
    %c0_i32_0 = arith.constant 0 : i32
    %c0_i32_1 = arith.constant 0 : i32
    %c0_i32_2 = arith.constant 0 : i32
    return %c0_i32, %c0_i32_0, %c0_i32_1 : i32, i32, i32
  }
  func.func @transform_17(%arg0: i32) -> (i32, i32, i32) {
    %c0_i32 = arith.constant 0 : i32
    %c0_i32_0 = arith.constant 0 : i32
    %c0_i32_1 = arith.constant 0 : i32
    %c0_i32_2 = arith.constant 0 : i32
    return %c0_i32, %c0_i32_0, %c0_i32_1 : i32, i32, i32
  }
  func.func @transform_18(%arg0: i32) -> (i32, i32, i32) {
    %c0_i32 = arith.constant 0 : i32
    %c0_i32_0 = arith.constant 0 : i32
    %c0_i32_1 = arith.constant 0 : i32
    %c0_i32_2 = arith.constant 0 : i32
    return %c0_i32, %c0_i32_0, %c0_i32_1 : i32, i32, i32
  }
  func.func @transform_19(%arg0: i32) -> (i32, i32, i32) {
    %c0_i32 = arith.constant 0 : i32
    %c0_i32_0 = arith.constant 0 : i32
    %c0_i32_1 = arith.constant 0 : i32
    %c0_i32_2 = arith.constant 0 : i32
    return %c0_i32, %c0_i32_0, %c0_i32_1 : i32, i32, i32
  }
  func.func @transform_20(%arg0: i32) -> (i32, i32, i32) {
    %c0_i32 = arith.constant 0 : i32
    %c0_i32_0 = arith.constant 0 : i32
    %c0_i32_1 = arith.constant 0 : i32
    %c0_i32_2 = arith.constant 0 : i32
    return %c0_i32, %c0_i32_0, %c0_i32_1 : i32, i32, i32
  }
  func.func @transform_21(%arg0: i32) -> (i32, i32, i32) {
    %c0_i32 = arith.constant 0 : i32
    %c0_i32_0 = arith.constant 0 : i32
    %c0_i32_1 = arith.constant 0 : i32
    %c0_i32_2 = arith.constant 0 : i32
    return %c0_i32, %c0_i32_0, %c0_i32_1 : i32, i32, i32
  }
  func.func @transform_22(%arg0: i32) -> (i32, i32, i32) {
    %c0_i32 = arith.constant 0 : i32
    %c0_i32_0 = arith.constant 0 : i32
    %c0_i32_1 = arith.constant 0 : i32
    %c0_i32_2 = arith.constant 0 : i32
    return %c0_i32, %c0_i32_0, %c0_i32_1 : i32, i32, i32
  }
  func.func @transform_23(%arg0: i32) -> (i32, i32) {
    %c0_i32 = arith.constant 0 : i32
    %c0_i32_0 = arith.constant 0 : i32
    %c0_i32_1 = arith.constant 0 : i32
    return %c0_i32, %c0_i32_0 : i32, i32
  }
  func.func @transform_24(%arg0: i32) -> (i32, i32) {
    %c0_i32 = arith.constant 0 : i32
    %c0_i32_0 = arith.constant 0 : i32
    %c0_i32_1 = arith.constant 0 : i32
    return %c0_i32, %c0_i32_0 : i32, i32
  }
  func.func @transform_25(%arg0: i32) -> (i32, i32) {
    %c0_i32 = arith.constant 0 : i32
    %c0_i32_0 = arith.constant 0 : i32
    %c0_i32_1 = arith.constant 0 : i32
    return %c0_i32, %c0_i32_0 : i32, i32
  }
  func.func @transform_26(%arg0: i32) -> (i32, i32, i32) {
    %c0_i32 = arith.constant 0 : i32
    %c0_i32_0 = arith.constant 0 : i32
    %c0_i32_1 = arith.constant 0 : i32
    return %arg0, %c0_i32, %c0_i32_0 : i32, i32, i32
  }
}

</mosaic_0001>

<llo_original>
// kernel: _lambda_.1
$region0: #{_lambda_.1}
  #allocation0 [shape = 'u32[]', space=smem, size = 0x4, offset = 0x4, fixed_abs, tag = 'smem constant byte address 0x4 - core index']
  #allocation1 [shape = 'u32[72,128]{1,0:T(1,128)}', space=vmem, size = 0x9000, scoped, tag = 'internal scratch']
  %s0 = inlined_call_operand.vmem [shape: f32[4,4,192], index: 0, kind: input, shape index: {}]
  %s1 = inlined_call_operand.vmem [shape: f32[192,32], index: 1, kind: input, shape index: {}]
  %s2 = inlined_call_operand.vmem [shape: f32[1,32], index: 2, kind: input, shape index: {}]
  %s3 = inlined_call_operand.vmem [shape: f32[1,32], index: 3, kind: input, shape index: {}]
  %s4 = inlined_call_operand.vmem [shape: f32[5,32], index: 4, kind: input, shape index: {}]
  %s5 = inlined_call_operand.vmem [shape: f32[1,32], index: 5, kind: input, shape index: {}]
  %s6 = inlined_call_operand.vmem [shape: f32[1,32], index: 6, kind: input, shape index: {}]
  %s7 = inlined_call_operand.vmem [shape: f32[2,1,32], index: 7, kind: input, shape index: {}]
  %s8 = inlined_call_operand.vmem [shape: f32[2,1,32], index: 8, kind: input, shape index: {}]
  %s9 = inlined_call_operand.vmem [shape: f32[2,2,32,16], index: 9, kind: input, shape index: {}]
  %s10 = inlined_call_operand.vmem [shape: f32[2,2,1,16], index: 10, kind: input, shape index: {}]
  %s11 = inlined_call_operand.vmem [shape: f32[2,2,32,16], index: 11, kind: input, shape index: {}]
  %s12 = inlined_call_operand.vmem [shape: f32[2,2,1,16], index: 12, kind: input, shape index: {}]
  %s13 = inlined_call_operand.vmem [shape: f32[2,2,32,16], index: 13, kind: input, shape index: {}]
  %s14 = inlined_call_operand.vmem [shape: f32[2,2,1,16], index: 14, kind: input, shape index: {}]
  %s15 = inlined_call_operand.vmem [shape: f32[2,2,16,32], index: 15, kind: input, shape index: {}]
  %s16 = inlined_call_operand.vmem [shape: f32[2,1,32], index: 16, kind: input, shape index: {}]
  %s17 = inlined_call_operand.vmem [shape: f32[2,1,32], index: 17, kind: input, shape index: {}]
  %s18 = inlined_call_operand.vmem [shape: f32[2,1,32], index: 18, kind: input, shape index: {}]
  %s19 = inlined_call_operand.vmem [shape: f32[2,32,128], index: 19, kind: input, shape index: {}]
  %s20 = inlined_call_operand.vmem [shape: f32[2,1,128], index: 20, kind: input, shape index: {}]
  %s21 = inlined_call_operand.vmem [shape: f32[2,128,32], index: 21, kind: input, shape index: {}]
  %s22 = inlined_call_operand.vmem [shape: f32[2,1,32], index: 22, kind: input, shape index: {}]
  %s23 = inlined_call_operand.vmem [shape: f32[1,32], index: 23, kind: input, shape index: {}]
  %s24 = inlined_call_operand.vmem [shape: f32[1,32], index: 24, kind: input, shape index: {}]
  %s25 = inlined_call_operand.vmem [shape: f32[32,16], index: 25, kind: input, shape index: {}]
  %s26 = inlined_call_operand.vmem [shape: f32[4,1,16], index: 26, kind: output, shape index: {}]
  %s27 = sld [smem:[#allocation0]]
  $region144: #{_lambda_.1} parent=0
    _
  %s29 = ssub.s32 1, %s27
  %s30 = scalar_select 0, %s29, %s27
  loop: start=0, step=1, limit=6
  $region2: #{_lambda_.1} parent=0 // loop_pre_header
    _
  $region3: #{_lambda_.1} parent=0 // loop_header
    %s32 = sphi 0, %s36
    %p33 = scmp.ge.s32.totalorder %s32, 6
    %s42 = sphi 0, %s44
    %s45 = sphi 0, %s42
    %s46 = sphi 0, %s45
    %s62 = sphi 0, %s46
    %s66 = sphi 0, %s66
    %s68 = sphi 0, %s66
    %s69 = sphi 0, %s68
    %s83 = sphi 0, %s69
    %s87 = sphi 0, %s87
    %s89 = sphi 0, %s87
    %s90 = sphi 0, %s89
    %s104 = sphi 0, %s90
    %s108 = sphi 0, %s108
    %s110 = sphi 0, %s108
    %s111 = sphi 0, %s110
    %s125 = sphi 0, %s111
    %s129 = sphi 0, %s129
    %s131 = sphi 0, %s129
    %s132 = sphi 0, %s131
    %s146 = sphi 0, %s132
    %s150 = sphi 0, %s150
    %s152 = sphi 0, %s150
    %s153 = sphi 0, %s152
    %s167 = sphi 0, %s153
    %s171 = sphi 0, %s171
    %s173 = sphi 0, %s171
    %s174 = sphi 0, %s173
    %s188 = sphi 0, %s174
    %s192 = sphi 0, %s192
    %s194 = sphi 0, %s192
    %s195 = sphi 0, %s194
    %s209 = sphi 0, %s195
    %s213 = sphi 0, %s213
    %s215 = sphi 0, %s213
    %s216 = sphi 0, %s215
    %s230 = sphi 0, %s216
    %s234 = sphi 0, %s234
    %s236 = sphi 0, %s234
    %s237 = sphi 0, %s236
    %s251 = sphi 0, %s237
    %s255 = sphi 0, %s255
    %s257 = sphi 0, %s255
    %s258 = sphi 0, %s257
    %s272 = sphi 0, %s258
    %s276 = sphi 0, %s276
    %s278 = sphi 0, %s276
    %s279 = sphi 0, %s278
    %s293 = sphi 0, %s279
    %s297 = sphi 0, %s297
    %s299 = sphi 0, %s297
    %s300 = sphi 0, %s299
    %s314 = sphi 0, %s300
    %s318 = sphi 0, %s318
    %s320 = sphi 0, %s318
    %s321 = sphi 0, %s320
    %s335 = sphi 0, %s321
    %s339 = sphi 0, %s339
    %s341 = sphi 0, %s339
    %s342 = sphi 0, %s341
    %s356 = sphi 0, %s342
    %s360 = sphi 0, %s360
    %s362 = sphi 0, %s360
    %s363 = sphi 0, %s362
    %s377 = sphi 0, %s363
    %s381 = sphi 0, %s381
    %s383 = sphi 0, %s381
    %s384 = sphi 0, %s383
    %s398 = sphi 0, %s384
    %s402 = sphi 0, %s402
    %s404 = sphi 0, %s402
    %s405 = sphi 0, %s404
    %s419 = sphi 0, %s405
    %s423 = sphi 0, %s423
    %s425 = sphi 0, %s423
    %s426 = sphi 0, %s425
    %s440 = sphi 0, %s426
    %s444 = sphi 0, %s444
    %s446 = sphi 0, %s444
    %s447 = sphi 0, %s446
    %s461 = sphi 0, %s447
    %s465 = sphi 0, %s465
    %s467 = sphi 0, %s465
    %s468 = sphi 0, %s467
    %s482 = sphi 0, %s468
    %s486 = sphi 0, %s486
    %s488 = sphi 0, %s486
    %s489 = sphi 0, %s488
    %s503 = sphi 0, %s489
    %s507 = sphi 0, %s507
    %s509 = sphi 0, %s507
    %s510 = sphi 0, %s509
    %s524 = sphi 0, %s510
    %s528 = sphi 0, %s528
    %s530 = sphi 0, %s528
    %s531 = sphi 0, %s530
    %s545 = sphi 0, %s531
    %s549 = sphi 0, %s549
    %s551 = sphi 0, %s549
    %s552 = sphi 0, %s551
    %s566 = sphi 0, %s552
    %s570 = sphi 0, %s570
    %s572 = sphi 0, %s570
    %s573 = sphi 0, %s572
    %s587 = sphi 0, %s573
    %s593 = sphi 0, %s595
    %s596 = sphi 0, %s593
    %s597 = sphi 0, %s596
    %s613 = sphi 0, %s597
  $region4: #{_lambda_.1} parent=0 // loop_header_branch
    %35 = sbr.rel (%p33) target = $region8
  $region5: #{_lambda_.1} parent=0 // loop_body
    %s37 = ssub.s32 %s32, 1
    %s38 = ssub.s32 %s32, 2
    %s39 = sadd.s32 %s32, 1
    %s40 = ssub.s32 %s32, %s39
    %p41 = scmp.eq.s32.totalorder %s40, 0
    %s43 = sadd.s32 %s42, 1
    %s44 = scalar_select %p41, %s42, %s43
    %p47 = pneg %p41
    %p48 = scmp.eq.s32.totalorder %s32, 3
    %p49 = por %p47, %p48
    %p50 = scmp.ne.s32.totalorder %s42, %s45
    %p51 = scmp.eq.s32.totalorder %s32, 0
    %p52 = por %p50, %p51
    %p53 = scmp.ne.s32.totalorder %s42, %s45
    %p54 = scmp.eq.s32.totalorder %s37, 3
    %p55 = por %p53, %p54
    %p56 = scmp.ne.s32.totalorder %s45, %s46
    %p57 = scmp.eq.s32.totalorder %s37, 0
    %p58 = por %p56, %p57
    %p59 = scmp.ne.s32.totalorder %s45, %s46
    %p60 = scmp.eq.s32.totalorder %s38, 3
    %p61 = por %p59, %p60
    %p63 = scmp.ne.s32.totalorder %s46, %s62
    %p64 = scmp.eq.s32.totalorder %s38, 0
    %p65 = por %p63, %p64
    %s67 = sadd.s32 %s66, 1
    %p70 = scmp.eq.s32.totalorder %s32, 3
    %p71 = scmp.ne.s32.totalorder %s66, %s68
    %p72 = scmp.eq.s32.totalorder %s32, 0
    %p73 = por %p71, %p72
    %p74 = scmp.ne.s32.totalorder %s66, %s68
    %p75 = scmp.eq.s32.totalorder %s37, 3
    %p76 = por %p74, %p75
    %p77 = scmp.ne.s32.totalorder %s68, %s69
    %p78 = scmp.eq.s32.totalorder %s37, 0
    %p79 = por %p77, %p78
    %p80 = scmp.ne.s32.totalorder %s68, %s69
    %p81 = scmp.eq.s32.totalorder %s38, 3
    %p82 = por %p80, %p81
    %p84 = scmp.ne.s32.totalorder %s69, %s83
    %p85 = scmp.eq.s32.totalorder %s38, 0
    %p86 = por %p84, %p85
    %s88 = sadd.s32 %s87, 1
    %p91 = scmp.eq.s32.totalorder %s32, 3
    %p92 = scmp.ne.s32.totalorder %s87, %s89
    %p93 = scmp.eq.s32.totalorder %s32, 0
    %p94 = por %p92, %p93
    %p95 = scmp.ne.s32.totalorder %s87, %s89
    %p96 = scmp.eq.s32.totalorder %s37, 3
    %p97 = por %p95, %p96
    %p98 = scmp.ne.s32.totalorder %s89, %s90
    %p99 = scmp.eq.s32.totalorder %s37, 0
    %p100 = por %p98, %p99
    %p101 = scmp.ne.s32.totalorder %s89, %s90
    %p102 = scmp.eq.s32.totalorder %s38, 3
    %p103 = por %p101, %p102
    %p105 = scmp.ne.s32.totalorder %s90, %s104
    %p106 = scmp.eq.s32.totalorder %s38, 0
    %p107 = por %p105, %p106
    %s109 = sadd.s32 %s108, 1
    %p112 = scmp.eq.s32.totalorder %s32, 3
    %p113 = scmp.ne.s32.totalorder %s108, %s110
    %p114 = scmp.eq.s32.totalorder %s32, 0
    %p115 = por %p113, %p114
    %p116 = scmp.ne.s32.totalorder %s108, %s110
    %p117 = scmp.eq.s32.totalorder %s37, 3
    %p118 = por %p116, %p117
    %p119 = scmp.ne.s32.totalorder %s110, %s111
    %p120 = scmp.eq.s32.totalorder %s37, 0
    %p121 = por %p119, %p120
    %p122 = scmp.ne.s32.totalorder %s110, %s111
    %p123 = scmp.eq.s32.totalorder %s38, 3
    %p124 = por %p122, %p123
    %p126 = scmp.ne.s32.totalorder %s111, %s125
    %p127 = scmp.eq.s32.totalorder %s38, 0
    %p128 = por %p126, %p127
    %s130 = sadd.s32 %s129, 1
    %p133 = scmp.eq.s32.totalorder %s32, 3
    %p134 = scmp.ne.s32.totalorder %s129, %s131
    %p135 = scmp.eq.s32.totalorder %s32, 0
    %p136 = por %p134, %p135
    %p137 = scmp.ne.s32.totalorder %s129, %s131
    %p138 = scmp.eq.s32.totalorder %s37, 3
    %p139 = por %p137, %p138
    %p140 = scmp.ne.s32.totalorder %s131, %s132
    %p141 = scmp.eq.s32.totalorder %s37, 0
    %p142 = por %p140, %p141
    %p143 = scmp.ne.s32.totalorder %s131, %s132
    %p144 = scmp.eq.s32.totalorder %s38, 3
    %p145 = por %p143, %p144
    %p147 = scmp.ne.s32.totalorder %s132, %s146
    %p148 = scmp.eq.s32.totalorder %s38, 0
    %p149 = por %p147, %p148
    %s151 = sadd.s32 %s150, 1
    %p154 = scmp.eq.s32.totalorder %s32, 3
    %p155 = scmp.ne.s32.totalorder %s150, %s152
    %p156 = scmp.eq.s32.totalorder %s32, 0
    %p157 = por %p155, %p156
    %p158 = scmp.ne.s32.totalorder %s150, %s152
    %p159 = scmp.eq.s32.totalorder %s37, 3
    %p160 = por %p158, %p159
    %p161 = scmp.ne.s32.totalorder %s152, %s153
    %p162 = scmp.eq.s32.totalorder %s37, 0
    %p163 = por %p161, %p162
    %p164 = scmp.ne.s32.totalorder %s152, %s153
    %p165 = scmp.eq.s32.totalorder %s38, 3
    %p166 = por %p164, %p165
    %p168 = scmp.ne.s32.totalorder %s153, %s167
    %p169 = scmp.eq.s32.totalorder %s38, 0
    %p170 = por %p168, %p169
    %s172 = sadd.s32 %s171, 1
    %p175 = scmp.eq.s32.totalorder %s32, 3
    %p176 = scmp.ne.s32.totalorder %s171, %s173
    %p177 = scmp.eq.s32.totalorder %s32, 0
    %p178 = por %p176, %p177
    %p179 = scmp.ne.s32.totalorder %s171, %s173
    %p180 = scmp.eq.s32.totalorder %s37, 3
    %p181 = por %p179, %p180
    %p182 = scmp.ne.s32.totalorder %s173, %s174
    %p183 = scmp.eq.s32.totalorder %s37, 0
    %p184 = por %p182, %p183
    %p185 = scmp.ne.s32.totalorder %s173, %s174
    %p186 = scmp.eq.s32.totalorder %s38, 3
    %p187 = por %p185, %p186
    %p189 = scmp.ne.s32.totalorder %s174, %s188
    %p190 = scmp.eq.s32.totalorder %s38, 0
    %p191 = por %p189, %p190
    %s193 = sadd.s32 %s192, 1
    %p196 = scmp.eq.s32.totalorder %s32, 3
    %p197 = scmp.ne.s32.totalorder %s192, %s194
    %p198 = scmp.eq.s32.totalorder %s32, 0
    %p199 = por %p197, %p198
    %p200 = scmp.ne.s32.totalorder %s192, %s194
    %p201 = scmp.eq.s32.totalorder %s37, 3
    %p202 = por %p200, %p201
    %p203 = scmp.ne.s32.totalorder %s194, %s195
    %p204 = scmp.eq.s32.totalorder %s37, 0
    %p205 = por %p203, %p204
    %p206 = scmp.ne.s32.totalorder %s194, %s195
    %p207 = scmp.eq.s32.totalorder %s38, 3
    %p208 = por %p206, %p207
    %p210 = scmp.ne.s32.totalorder %s195, %s209
    %p211 = scmp.eq.s32.totalorder %s38, 0
    %p212 = por %p210, %p211
    %s214 = sadd.s32 %s213, 1
    %p217 = scmp.eq.s32.totalorder %s32, 3
    %p218 = scmp.ne.s32.totalorder %s213, %s215
    %p219 = scmp.eq.s32.totalorder %s32, 0
    %p220 = por %p218, %p219
    %p221 = scmp.ne.s32.totalorder %s213, %s215
    %p222 = scmp.eq.s32.totalorder %s37, 3
    %p223 = por %p221, %p222
    %p224 = scmp.ne.s32.totalorder %s215, %s216
    %p225 = scmp.eq.s32.totalorder %s37, 0
    %p226 = por %p224, %p225
    %p227 = scmp.ne.s32.totalorder %s215, %s216
    %p228 = scmp.eq.s32.totalorder %s38, 3
    %p229 = por %p227, %p228
    %p231 = scmp.ne.s32.totalorder %s216, %s230
    %p232 = scmp.eq.s32.totalorder %s38, 0
    %p233 = por %p231, %p232
    %s235 = sadd.s32 %s234, 1
    %p238 = scmp.eq.s32.totalorder %s32, 3
    %p239 = scmp.ne.s32.totalorder %s234, %s236
    %p240 = scmp.eq.s32.totalorder %s32, 0
    %p241 = por %p239, %p240
    %p242 = scmp.ne.s32.totalorder %s234, %s236
    %p243 = scmp.eq.s32.totalorder %s37, 3
    %p244 = por %p242, %p243
    %p245 = scmp.ne.s32.totalorder %s236, %s237
    %p246 = scmp.eq.s32.totalorder %s37, 0
    %p247 = por %p245, %p246
    %p248 = scmp.ne.s32.totalorder %s236, %s237
    %p249 = scmp.eq.s32.totalorder %s38, 3
    %p250 = por %p248, %p249
    %p252 = scmp.ne.s32.totalorder %s237, %s251
    %p253 = scmp.eq.s32.totalorder %s38, 0
    %p254 = por %p252, %p253
    %s256 = sadd.s32 %s255, 1
    %p259 = scmp.eq.s32.totalorder %s32, 3
    %p260 = scmp.ne.s32.totalorder %s255, %s257
    %p261 = scmp.eq.s32.totalorder %s32, 0
    %p262 = por %p260, %p261
    %p263 = scmp.ne.s32.totalorder %s255, %s257
    %p264 = scmp.eq.s32.totalorder %s37, 3
    %p265 = por %p263, %p264
    %p266 = scmp.ne.s32.totalorder %s257, %s258
    %p267 = scmp.eq.s32.totalorder %s37, 0
    %p268 = por %p266, %p267
    %p269 = scmp.ne.s32.totalorder %s257, %s258
    %p270 = scmp.eq.s32.totalorder %s38, 3
    %p271 = por %p269, %p270
    %p273 = scmp.ne.s32.totalorder %s258, %s272
    %p274 = scmp.eq.s32.totalorder %s38, 0
    %p275 = por %p273, %p274
    %s277 = sadd.s32 %s276, 1
    %p280 = scmp.eq.s32.totalorder %s32, 3
    %p281 = scmp.ne.s32.totalorder %s276, %s278
    %p282 = scmp.eq.s32.totalorder %s32, 0
    %p283 = por %p281, %p282
    %p284 = scmp.ne.s32.totalorder %s276, %s278
    %p285 = scmp.eq.s32.totalorder %s37, 3
    %p286 = por %p284, %p285
    %p287 = scmp.ne.s32.totalorder %s278, %s279
    %p288 = scmp.eq.s32.totalorder %s37, 0
    %p289 = por %p287, %p288
    %p290 = scmp.ne.s32.totalorder %s278, %s279
    %p291 = scmp.eq.s32.totalorder %s38, 3
    %p292 = por %p290, %p291
    %p294 = scmp.ne.s32.totalorder %s279, %s293
    %p295 = scmp.eq.s32.totalorder %s38, 0
    %p296 = por %p294, %p295
    %s298 = sadd.s32 %s297, 1
    %p301 = scmp.eq.s32.totalorder %s32, 3
    %p302 = scmp.ne.s32.totalorder %s297, %s299
    %p303 = scmp.eq.s32.totalorder %s32, 0
    %p304 = por %p302, %p303
    %p305 = scmp.ne.s32.totalorder %s297, %s299
    %p306 = scmp.eq.s32.totalorder %s37, 3
    %p307 = por %p305, %p306
    %p308 = scmp.ne.s32.totalorder %s299, %s300
    %p309 = scmp.eq.s32.totalorder %s37, 0
    %p310 = por %p308, %p309
    %p311 = scmp.ne.s32.totalorder %s299, %s300
    %p312 = scmp.eq.s32.totalorder %s38, 3
    %p313 = por %p311, %p312
    %p315 = scmp.ne.s32.totalorder %s300, %s314
    %p316 = scmp.eq.s32.totalorder %s38, 0
    %p317 = por %p315, %p316
    %s319 = sadd.s32 %s318, 1
    %p322 = scmp.eq.s32.totalorder %s32, 3
    %p323 = scmp.ne.s32.totalorder %s318, %s320
    %p324 = scmp.eq.s32.totalorder %s32, 0
    %p325 = por %p323, %p324
    %p326 = scmp.ne.s32.totalorder %s318, %s320
    %p327 = scmp.eq.s32.totalorder %s37, 3
    %p328 = por %p326, %p327
    %p329 = scmp.ne.s32.totalorder %s320, %s321
    %p330 = scmp.eq.s32.totalorder %s37, 0
    %p331 = por %p329, %p330
    %p332 = scmp.ne.s32.totalorder %s320, %s321
    %p333 = scmp.eq.s32.totalorder %s38, 3
    %p334 = por %p332, %p333
    %p336 = scmp.ne.s32.totalorder %s321, %s335
    %p337 = scmp.eq.s32.totalorder %s38, 0
    %p338 = por %p336, %p337
    %s340 = sadd.s32 %s339, 1
    %p343 = scmp.eq.s32.totalorder %s32, 3
    %p344 = scmp.ne.s32.totalorder %s339, %s341
    %p345 = scmp.eq.s32.totalorder %s32, 0
    %p346 = por %p344, %p345
    %p347 = scmp.ne.s32.totalorder %s339, %s341
    %p348 = scmp.eq.s32.totalorder %s37, 3
    %p349 = por %p347, %p348
    %p350 = scmp.ne.s32.totalorder %s341, %s342
    %p351 = scmp.eq.s32.totalorder %s37, 0
    %p352 = por %p350, %p351
    %p353 = scmp.ne.s32.totalorder %s341, %s342
    %p354 = scmp.eq.s32.totalorder %s38, 3
    %p355 = por %p353, %p354
    %p357 = scmp.ne.s32.totalorder %s342, %s356
    %p358 = scmp.eq.s32.totalorder %s38, 0
    %p359 = por %p357, %p358
    %s361 = sadd.s32 %s360, 1
    %p364 = scmp.eq.s32.totalorder %s32, 3
    %p365 = scmp.ne.s32.totalorder %s360, %s362
    %p366 = scmp.eq.s32.totalorder %s32, 0
    %p367 = por %p365, %p366
    %p368 = scmp.ne.s32.totalorder %s360, %s362
    %p369 = scmp.eq.s32.totalorder %s37, 3
    %p370 = por %p368, %p369
    %p371 = scmp.ne.s32.totalorder %s362, %s363
    %p372 = scmp.eq.s32.totalorder %s37, 0
    %p373 = por %p371, %p372
    %p374 = scmp.ne.s32.totalorder %s362, %s363
    %p375 = scmp.eq.s32.totalorder %s38, 3
    %p376 = por %p374, %p375
    %p378 = scmp.ne.s32.totalorder %s363, %s377
    %p379 = scmp.eq.s32.totalorder %s38, 0
    %p380 = por %p378, %p379
    %s382 = sadd.s32 %s381, 1
    %p385 = scmp.eq.s32.totalorder %s32, 3
    %p386 = scmp.ne.s32.totalorder %s381, %s383
    %p387 = scmp.eq.s32.totalorder %s32, 0
    %p388 = por %p386, %p387
    %p389 = scmp.ne.s32.totalorder %s381, %s383
    %p390 = scmp.eq.s32.totalorder %s37, 3
    %p391 = por %p389, %p390
    %p392 = scmp.ne.s32.totalorder %s383, %s384
    %p393 = scmp.eq.s32.totalorder %s37, 0
    %p394 = por %p392, %p393
    %p395 = scmp.ne.s32.totalorder %s383, %s384
    %p396 = scmp.eq.s32.totalorder %s38, 3
    %p397 = por %p395, %p396
    %p399 = scmp.ne.s32.totalorder %s384, %s398
    %p400 = scmp.eq.s32.totalorder %s38, 0
    %p401 = por %p399, %p400
    %s403 = sadd.s32 %s402, 1
    %p406 = scmp.eq.s32.totalorder %s32, 3
    %p407 = scmp.ne.s32.totalorder %s402, %s404
    %p408 = scmp.eq.s32.totalorder %s32, 0
    %p409 = por %p407, %p408
    %p410 = scmp.ne.s32.totalorder %s402, %s404
    %p411 = scmp.eq.s32.totalorder %s37, 3
    %p412 = por %p410, %p411
    %p413 = scmp.ne.s32.totalorder %s404, %s405
    %p414 = scmp.eq.s32.totalorder %s37, 0
    %p415 = por %p413, %p414
    %p416 = scmp.ne.s32.totalorder %s404, %s405
    %p417 = scmp.eq.s32.totalorder %s38, 3
    %p418 = por %p416, %p417
    %p420 = scmp.ne.s32.totalorder %s405, %s419
    %p421 = scmp.eq.s32.totalorder %s38, 0
    %p422 = por %p420, %p421
    %s424 = sadd.s32 %s423, 1
    %p427 = scmp.eq.s32.totalorder %s32, 3
    %p428 = scmp.ne.s32.totalorder %s423, %s425
    %p429 = scmp.eq.s32.totalorder %s32, 0
    %p430 = por %p428, %p429
    %p431 = scmp.ne.s32.totalorder %s423, %s425
    %p432 = scmp.eq.s32.totalorder %s37, 3
    %p433 = por %p431, %p432
    %p434 = scmp.ne.s32.totalorder %s425, %s426
    %p435 = scmp.eq.s32.totalorder %s37, 0
    %p436 = por %p434, %p435
    %p437 = scmp.ne.s32.totalorder %s425, %s426
    %p438 = scmp.eq.s32.totalorder %s38, 3
    %p439 = por %p437, %p438
    %p441 = scmp.ne.s32.totalorder %s426, %s440
    %p442 = scmp.eq.s32.totalorder %s38, 0
    %p443 = por %p441, %p442
    %s445 = sadd.s32 %s444, 1
    %p448 = scmp.eq.s32.totalorder %s32, 3
    %p449 = scmp.ne.s32.totalorder %s444, %s446
    %p450 = scmp.eq.s32.totalorder %s32, 0
    %p451 = por %p449, %p450
    %p452 = scmp.ne.s32.totalorder %s444, %s446
    %p453 = scmp.eq.s32.totalorder %s37, 3
    %p454 = por %p452, %p453
    %p455 = scmp.ne.s32.totalorder %s446, %s447
    %p456 = scmp.eq.s32.totalorder %s37, 0
    %p457 = por %p455, %p456
    %p458 = scmp.ne.s32.totalorder %s446, %s447
    %p459 = scmp.eq.s32.totalorder %s38, 3
    %p460 = por %p458, %p459
    %p462 = scmp.ne.s32.totalorder %s447, %s461
    %p463 = scmp.eq.s32.totalorder %s38, 0
    %p464 = por %p462, %p463
    %s466 = sadd.s32 %s465, 1
    %p469 = scmp.eq.s32.totalorder %s32, 3
    %p470 = scmp.ne.s32.totalorder %s465, %s467
    %p471 = scmp.eq.s32.totalorder %s32, 0
    %p472 = por %p470, %p471
    %p473 = scmp.ne.s32.totalorder %s465, %s467
    %p474 = scmp.eq.s32.totalorder %s37, 3
    %p475 = por %p473, %p474
    %p476 = scmp.ne.s32.totalorder %s467, %s468
    %p477 = scmp.eq.s32.totalorder %s37, 0
    %p478 = por %p476, %p477
    %p479 = scmp.ne.s32.totalorder %s467, %s468
    %p480 = scmp.eq.s32.totalorder %s38, 3
    %p481 = por %p479, %p480
    %p483 = scmp.ne.s32.totalorder %s468, %s482
    %p484 = scmp.eq.s32.totalorder %s38, 0
    %p485 = por %p483, %p484
    %s487 = sadd.s32 %s486, 1
    %p490 = scmp.eq.s32.totalorder %s32, 3
    %p491 = scmp.ne.s32.totalorder %s486, %s488
    %p492 = scmp.eq.s32.totalorder %s32, 0
    %p493 = por %p491, %p492
    %p494 = scmp.ne.s32.totalorder %s486, %s488
    %p495 = scmp.eq.s32.totalorder %s37, 3
    %p496 = por %p494, %p495
    %p497 = scmp.ne.s32.totalorder %s488, %s489
    %p498 = scmp.eq.s32.totalorder %s37, 0
    %p499 = por %p497, %p498
    %p500 = scmp.ne.s32.totalorder %s488, %s489
    %p501 = scmp.eq.s32.totalorder %s38, 3
    %p502 = por %p500, %p501
    %p504 = scmp.ne.s32.totalorder %s489, %s503
    %p505 = scmp.eq.s32.totalorder %s38, 0
    %p506 = por %p504, %p505
    %s508 = sadd.s32 %s507, 1
    %p511 = scmp.eq.s32.totalorder %s32, 3
    %p512 = scmp.ne.s32.totalorder %s507, %s509
    %p513 = scmp.eq.s32.totalorder %s32, 0
    %p514 = por %p512, %p513
    %p515 = scmp.ne.s32.totalorder %s507, %s509
    %p516 = scmp.eq.s32.totalorder %s37, 3
    %p517 = por %p515, %p516
    %p518 = scmp.ne.s32.totalorder %s509, %s510
    %p519 = scmp.eq.s32.totalorder %s37, 0
    %p520 = por %p518, %p519
    %p521 = scmp.ne.s32.totalorder %s509, %s510
    %p522 = scmp.eq.s32.totalorder %s38, 3
    %p523 = por %p521, %p522
    %p525 = scmp.ne.s32.totalorder %s510, %s524
    %p526 = scmp.eq.s32.totalorder %s38, 0
    %p527 = por %p525, %p526
    %s529 = sadd.s32 %s528, 1
    %p532 = scmp.eq.s32.totalorder %s32, 3
    %p533 = scmp.ne.s32.totalorder %s528, %s530
    %p534 = scmp.eq.s32.totalorder %s32, 0
    %p535 = por %p533, %p534
    %p536 = scmp.ne.s32.totalorder %s528, %s530
    %p537 = scmp.eq.s32.totalorder %s37, 3
    %p538 = por %p536, %p537
    %p539 = scmp.ne.s32.totalorder %s530, %s531
    %p540 = scmp.eq.s32.totalorder %s37, 0
    %p541 = por %p539, %p540
    %p542 = scmp.ne.s32.totalorder %s530, %s531
    %p543 = scmp.eq.s32.totalorder %s38, 3
    %p544 = por %p542, %p543
    %p546 = scmp.ne.s32.totalorder %s531, %s545
    %p547 = scmp.eq.s32.totalorder %s38, 0
    %p548 = por %p546, %p547
    %s550 = sadd.s32 %s549, 1
    %p553 = scmp.eq.s32.totalorder %s32, 3
    %p554 = scmp.ne.s32.totalorder %s549, %s551
    %p555 = scmp.eq.s32.totalorder %s32, 0
    %p556 = por %p554, %p555
    %p557 = scmp.ne.s32.totalorder %s549, %s551
    %p558 = scmp.eq.s32.totalorder %s37, 3
    %p559 = por %p557, %p558
    %p560 = scmp.ne.s32.totalorder %s551, %s552
    %p561 = scmp.eq.s32.totalorder %s37, 0
    %p562 = por %p560, %p561
    %p563 = scmp.ne.s32.totalorder %s551, %s552
    %p564 = scmp.eq.s32.totalorder %s38, 3
    %p565 = por %p563, %p564
    %p567 = scmp.ne.s32.totalorder %s552, %s566
    %p568 = scmp.eq.s32.totalorder %s38, 0
    %p569 = por %p567, %p568
    %s571 = sadd.s32 %s570, 1
    %p574 = scmp.eq.s32.totalorder %s32, 3
    %p575 = scmp.ne.s32.totalorder %s570, %s572
    %p576 = scmp.eq.s32.totalorder %s32, 0
    %p577 = por %p575, %p576
    %p578 = scmp.ne.s32.totalorder %s570, %s572
    %p579 = scmp.eq.s32.totalorder %s37, 3
    %p580 = por %p578, %p579
    %p581 = scmp.ne.s32.totalorder %s572, %s573
    %p582 = scmp.eq.s32.totalorder %s37, 0
    %p583 = por %p581, %p582
    %p584 = scmp.ne.s32.totalorder %s572, %s573
    %p585 = scmp.eq.s32.totalorder %s38, 3
    %p586 = por %p584, %p585
    %p588 = scmp.ne.s32.totalorder %s573, %s587
    %p589 = scmp.eq.s32.totalorder %s38, 0
    %p590 = por %p588, %p589
    %s591 = ssub.s32 %s32, %s39
    %p592 = scmp.eq.s32.totalorder %s591, 0
    %s594 = sadd.s32 %s593, 1
    %s595 = scalar_select %p592, %s593, %s594
    %p598 = pneg %p592
    %p599 = scmp.eq.s32.totalorder %s32, 3
    %p600 = por %p598, %p599
    %p601 = scmp.ne.s32.totalorder %s593, %s596
    %p602 = scmp.eq.s32.totalorder %s32, 0
    %p603 = por %p601, %p602
    %p604 = scmp.ne.s32.totalorder %s593, %s596
    %p605 = scmp.eq.s32.totalorder %s37, 3
    %p606 = por %p604, %p605
    %p607 = scmp.ne.s32.totalorder %s596, %s597
    %p608 = scmp.eq.s32.totalorder %s37, 0
    %p609 = por %p607, %p608
    %p610 = scmp.ne.s32.totalorder %s596, %s597
    %p611 = scmp.eq.s32.totalorder %s38, 3
    %p612 = por %p610, %p611
    %p614 = scmp.ne.s32.totalorder %s597, %s613
    %p615 = scmp.eq.s32.totalorder %s38, 0
    %p616 = por %p614, %p615
    %p617 = scmp.le.s32.totalorder 1, %s32
    %p618 = scmp.lt.s32.totalorder %s32, 5
    %p619 = pnand %p617, %p618
    %p620 = pneg %p619
    // Predicated region
    $region9: #{_lambda_.1} parent=5 // pred_check
      _
    $region10: #{_lambda_.1} parent=5 // pred_check_branch
      %622 = sbr.rel (%p619) target = $region12
    $region11: #{_lambda_.1} parent=5 // pred_region
      %s623 = ssub.s32 %s32, 1
      // Predicated region
      $region13: #{_lambda_.1} parent=11 // pred_check
        %p624 = pneg %p79
      $region14: #{_lambda_.1} parent=11 // pred_check_branch
        %626 = sbr.rel (%p624) target = $region16
      $region15: #{_lambda_.1} parent=11 // pred_region
        _
      $region16: #{_lambda_.1} parent=11 // pred_fallthru
        _
      // Predicated region
      $region17: #{_lambda_.1} parent=11 // pred_check
        %p627 = pneg %p100
      $region18: #{_lambda_.1} parent=11 // pred_check_branch
        %629 = sbr.rel (%p627) target = $region20
      $region19: #{_lambda_.1} parent=11 // pred_region
        _
      $region20: #{_lambda_.1} parent=11 // pred_fallthru
        _
      // Predicated region
      $region21: #{_lambda_.1} parent=11 // pred_check
        %p630 = pneg %p121
      $region22: #{_lambda_.1} parent=11 // pred_check_branch
        %632 = sbr.rel (%p630) target = $region24
      $region23: #{_lambda_.1} parent=11 // pred_region
        _
      $region24: #{_lambda_.1} parent=11 // pred_fallthru
        _
      // Predicated region
      $region25: #{_lambda_.1} parent=11 // pred_check
        %p633 = pneg %p142
      $region26: #{_lambda_.1} parent=11 // pred_check_branch
        %635 = sbr.rel (%p633) target = $region28
      $region27: #{_lambda_.1} parent=11 // pred_region
        _
      $region28: #{_lambda_.1} parent=11 // pred_fallthru
        _
      // Predicated region
      $region29: #{_lambda_.1} parent=11 // pred_check
        %p636 = pneg %p163
      $region30: #{_lambda_.1} parent=11 // pred_check_branch
        %638 = sbr.rel (%p636) target = $region32
      $region31: #{_lambda_.1} parent=11 // pred_region
        _
      $region32: #{_lambda_.1} parent=11 // pred_fallthru
        _
      // Predicated region
      $region33: #{_lambda_.1} parent=11 // pred_check
        %p639 = pneg %p184
      $region34: #{_lambda_.1} parent=11 // pred_check_branch
        %641 = sbr.rel (%p639) target = $region36
      $region35: #{_lambda_.1} parent=11 // pred_region
        _
      $region36: #{_lambda_.1} parent=11 // pred_fallthru
        _
      // Predicated region
      $region37: #{_lambda_.1} parent=11 // pred_check
        %p642 = pneg %p205
      $region38: #{_lambda_.1} parent=11 // pred_check_branch
        %644 = sbr.rel (%p642) target = $region40
      $region39: #{_lambda_.1} parent=11 // pred_region
        _
      $region40: #{_lambda_.1} parent=11 // pred_fallthru
        _
      // Predicated region
      $region41: #{_lambda_.1} parent=11 // pred_check
        %p645 = pneg %p226
      $region42: #{_lambda_.1} parent=11 // pred_check_branch
        %647 = sbr.rel (%p645) target = $region44
      $region43: #{_lambda_.1} parent=11 // pred_region
        _
      $region44: #{_lambda_.1} parent=11 // pred_fallthru
        _
      // Predicated region
      $region45: #{_lambda_.1} parent=11 // pred_check
        %p648 = pneg %p247
      $region46: #{_lambda_.1} parent=11 // pred_check_branch
        %650 = sbr.rel (%p648) target = $region48
      $region47: #{_lambda_.1} parent=11 // pred_region
        _
      $region48: #{_lambda_.1} parent=11 // pred_fallthru
        _
      // Predicated region
      $region49: #{_lambda_.1} parent=11 // pred_check
        %p651 = pneg %p268
      $region50: #{_lambda_.1} parent=11 // pred_check_branch
        %653 = sbr.rel (%p651) target = $region52
      $region51: #{_lambda_.1} parent=11 // pred_region
        _
      $region52: #{_lambda_.1} parent=11 // pred_fallthru
        _
      // Predicated region
      $region53: #{_lambda_.1} parent=11 // pred_check
        %p654 = pneg %p289
      $region54: #{_lambda_.1} parent=11 // pred_check_branch
        %656 = sbr.rel (%p654) target = $region56
      $region55: #{_lambda_.1} parent=11 // pred_region
        _
      $region56: #{_lambda_.1} parent=11 // pred_fallthru
        _
      // Predicated region
      $region57: #{_lambda_.1} parent=11 // pred_check
        %p657 = pneg %p310
      $region58: #{_lambda_.1} parent=11 // pred_check_branch
        %659 = sbr.rel (%p657) target = $region60
      $region59: #{_lambda_.1} parent=11 // pred_region
        _
      $region60: #{_lambda_.1} parent=11 // pred_fallthru
        _
      // Predicated region
      $region61: #{_lambda_.1} parent=11 // pred_check
        %p660 = pneg %p331
      $region62: #{_lambda_.1} parent=11 // pred_check_branch
        %662 = sbr.rel (%p660) target = $region64
      $region63: #{_lambda_.1} parent=11 // pred_region
        _
      $region64: #{_lambda_.1} parent=11 // pred_fallthru
        _
      // Predicated region
      $region65: #{_lambda_.1} parent=11 // pred_check
        %p663 = pneg %p352
      $region66: #{_lambda_.1} parent=11 // pred_check_branch
        %665 = sbr.rel (%p663) target = $region68
      $region67: #{_lambda_.1} parent=11 // pred_region
        _
      $region68: #{_lambda_.1} parent=11 // pred_fallthru
        _
      // Predicated region
      $region69: #{_lambda_.1} parent=11 // pred_check
        %p666 = pneg %p373
      $region70: #{_lambda_.1} parent=11 // pred_check_branch
        %668 = sbr.rel (%p666) target = $region72
      $region71: #{_lambda_.1} parent=11 // pred_region
        _
      $region72: #{_lambda_.1} parent=11 // pred_fallthru
        _
      // Predicated region
      $region73: #{_lambda_.1} parent=11 // pred_check
        %p669 = pneg %p394
      $region74: #{_lambda_.1} parent=11 // pred_check_branch
        %671 = sbr.rel (%p669) target = $region76
      $region75: #{_lambda_.1} parent=11 // pred_region
        _
      $region76: #{_lambda_.1} parent=11 // pred_fallthru
        _
      // Predicated region
      $region77: #{_lambda_.1} parent=11 // pred_check
        %p672 = pneg %p415
      $region78: #{_lambda_.1} parent=11 // pred_check_branch
        %674 = sbr.rel (%p672) target = $region80
      $region79: #{_lambda_.1} parent=11 // pred_region
        _
      $region80: #{_lambda_.1} parent=11 // pred_fallthru
        _
      // Predicated region
      $region81: #{_lambda_.1} parent=11 // pred_check
        %p675 = pneg %p436
      $region82: #{_lambda_.1} parent=11 // pred_check_branch
        %677 = sbr.rel (%p675) target = $region84
      $region83: #{_lambda_.1} parent=11 // pred_region
        _
      $region84: #{_lambda_.1} parent=11 // pred_fallthru
        _
      // Predicated region
      $region85: #{_lambda_.1} parent=11 // pred_check
        %p678 = pneg %p457
      $region86: #{_lambda_.1} parent=11 // pred_check_branch
        %680 = sbr.rel (%p678) target = $region88
      $region87: #{_lambda_.1} parent=11 // pred_region
        _
      $region88: #{_lambda_.1} parent=11 // pred_fallthru
        _
      // Predicated region
      $region89: #{_lambda_.1} parent=11 // pred_check
        %p681 = pneg %p478
      $region90: #{_lambda_.1} parent=11 // pred_check_branch
        %683 = sbr.rel (%p681) target = $region92
      $region91: #{_lambda_.1} parent=11 // pred_region
        _
      $region92: #{_lambda_.1} parent=11 // pred_fallthru
        _
      // Predicated region
      $region93: #{_lambda_.1} parent=11 // pred_check
        %p684 = pneg %p499
      $region94: #{_lambda_.1} parent=11 // pred_check_branch
        %686 = sbr.rel (%p684) target = $region96
      $region95: #{_lambda_.1} parent=11 // pred_region
        _
      $region96: #{_lambda_.1} parent=11 // pred_fallthru
        _
      // Predicated region
      $region97: #{_lambda_.1} parent=11 // pred_check
        %p687 = pneg %p520
      $region98: #{_lambda_.1} parent=11 // pred_check_branch
        %689 = sbr.rel (%p687) target = $region100
      $region99: #{_lambda_.1} parent=11 // pred_region
        _
      $region100: #{_lambda_.1} parent=11 // pred_fallthru
        _
      // Predicated region
      $region101: #{_lambda_.1} parent=11 // pred_check
        %p690 = pneg %p541
      $region102: #{_lambda_.1} parent=11 // pred_check_branch
        %692 = sbr.rel (%p690) target = $region104
      $region103: #{_lambda_.1} parent=11 // pred_region
        _
      $region104: #{_lambda_.1} parent=11 // pred_fallthru
        _
      // Predicated region
      $region105: #{_lambda_.1} parent=11 // pred_check
        %p693 = pneg %p562
      $region106: #{_lambda_.1} parent=11 // pred_check_branch
        %695 = sbr.rel (%p693) target = $region108
      $region107: #{_lambda_.1} parent=11 // pred_region
        _
      $region108: #{_lambda_.1} parent=11 // pred_fallthru
        _
      // Predicated region
      $region109: #{_lambda_.1} parent=11 // pred_check
        %p696 = pneg %p583
      $region110: #{_lambda_.1} parent=11 // pred_check_branch
        %698 = sbr.rel (%p696) target = $region112
      $region111: #{_lambda_.1} parent=11 // pred_region
        _
      $region112: #{_lambda_.1} parent=11 // pred_fallthru
        _
    $region12: #{_lambda_.1} parent=5 // pred_fallthru
      _
    %p699 = scmp.lt.s32.totalorder %s32, 4
    // Predicated region
    $region113: #{_lambda_.1} parent=5 // pred_check
      %p700 = pneg %p699
    $region114: #{_lambda_.1} parent=5 // pred_check_branch
      %702 = sbr.rel (%p700) target = $region116
    $region115: #{_lambda_.1} parent=5 // pred_region
      // Predicated region
      $region117: #{_lambda_.1} parent=115 // pred_check
        %p703 = pneg %p52
      $region118: #{_lambda_.1} parent=115 // pred_check_branch
        %705 = sbr.rel (%p703) target = $region120
      $region119: #{_lambda_.1} parent=115 // pred_region
        %p706 = scmp.lt.s32.totalorder %s32, 3
        %s707 = scalar_select %p706, %s32, 3
        %s708 = smul.addr %s707, 2
        %s709 = smul.addr %s708, 4
        %s710 = scalar_lea.vmem %s0, %s709
      $region120: #{_lambda_.1} parent=115 // pred_fallthru
        _
    $region116: #{_lambda_.1} parent=5 // pred_fallthru
      _
    %p711 = scmp.le.s32.totalorder 1, %s32
    %p712 = scmp.lt.s32.totalorder %s32, 5
    %p713 = pnand %p711, %p712
    %p714 = pneg %p713
    // Predicated region
    $region121: #{_lambda_.1} parent=5 // pred_check
      _
    $region122: #{_lambda_.1} parent=5 // pred_check_branch
      %716 = sbr.rel (%p713) target = $region124
    $region123: #{_lambda_.1} parent=5 // pred_region
      %s717 = ssub.s32 %s32, 1
      %p718 = scmp.lt.s32.totalorder %s37, 3
      %s719 = scalar_select %p718, %s37, 3
      %s720 = smul.addr %s719, 2
      %s721 = smul.addr %s720, 4
      %s722 = scalar_lea.vmem %s0, %s721
      %p723 = pneg %p58
      %p724 = pneg %p55
      %p725 = pneg %p79
      %p726 = pneg %p76
      %p727 = pneg %p100
      %p728 = pneg %p97
      %p729 = pneg %p121
      %p730 = pneg %p118
      %p731 = pneg %p142
      %p732 = pneg %p139
      %p733 = pneg %p163
      %p734 = pneg %p160
      %p735 = pneg %p184
      %p736 = pneg %p181
      %p737 = pneg %p205
      %p738 = pneg %p202
      %p739 = pneg %p226
      %p740 = pneg %p223
      %p741 = pneg %p247
      %p742 = pneg %p244
      %p743 = pneg %p268
      %p744 = pneg %p265
      %p745 = pneg %p289
      %p746 = pneg %p286
      %p747 = pneg %p310
      %p748 = pneg %p307
      %p749 = pneg %p331
      %p750 = pneg %p328
      %p751 = pneg %p352
      %p752 = pneg %p349
      %p753 = pneg %p373
      %p754 = pneg %p370
      %p755 = pneg %p394
      %p756 = pneg %p391
      %p757 = pneg %p415
      %p758 = pneg %p412
      %p759 = pneg %p436
      %p760 = pneg %p433
      %p761 = pneg %p457
      %p762 = pneg %p454
      %p763 = pneg %p478
      %p764 = pneg %p475
      %p765 = pneg %p499
      %p766 = pneg %p496
      %p767 = pneg %p520
      %p768 = pneg %p517
      %p769 = pneg %p541
      %p770 = pneg %p538
      %p771 = pneg %p562
      %p772 = pneg %p559
      %p773 = pneg %p583
      %p774 = pneg %p580
      %p775 = pneg %p609
      %p776 = pneg %p606
      %p777 = scmp.lt.s32.totalorder %s37, 3
      %s778 = scalar_select %p777, %s37, 3
      %s779 = scalar_lea.vmem %s26, %s778
      %p780 = scmp.lt.s32.totalorder %s37, 3
      %s781 = scalar_select %p780, %s37, 3
      %s782 = smul.addr %s781, 2
      %s783 = smul.addr %s782, 4
      %s784 = scalar_lea.vmem %s0, %s783
      %p785 = scmp.lt.s32.totalorder %s37, 3
      %s786 = scalar_select %p785, %s37, 3
      %s787 = scalar_lea.vmem %s26, %s786
      %v788 = vld [vmem:[%s784] sm:$0xff]
      %v789 = vld [vmem:[%s1] sm:$0xff]
      %v790 = vld [vmem:[%s1 + $0x8] sm:$0xff]
      %v791 = vld [vmem:[%s1 + $0x10] sm:$0xff]
      %v792 = vld [vmem:[%s1 + $0x18] sm:$0xff]
      %v793 = vld [vmem:[%s1 + $0x20] sm:$0xff]
      %v794 = vld [vmem:[%s1 + $0x28] sm:$0xff]
      %v795 = vld [vmem:[%s1 + $0x30] sm:$0xff]
      %v796 = vld [vmem:[%s1 + $0x38] sm:$0xff]
      %v797 = vld [vmem:[%s1 + $0x40] sm:$0xff]
      %v798 = vld [vmem:[%s1 + $0x48] sm:$0xff]
      %v799 = vld [vmem:[%s1 + $0x50] sm:$0xff]
      %v800 = vld [vmem:[%s1 + $0x58] sm:$0xff]
      %v801 = vld [vmem:[%s1 + $0x60] sm:$0xff]
      %v802 = vld [vmem:[%s1 + $0x68] sm:$0xff]
      %v803 = vld [vmem:[%s1 + $0x70] sm:$0xff]
      %v804 = vld [vmem:[%s1 + $0x78] sm:$0xff]
      %v805 = vld [vmem:[%s1 + $0x80] sm:$0xff]
      %v806 = vld [vmem:[%s1 + $0x88] sm:$0xff]
      %v807 = vld [vmem:[%s1 + $0x90] sm:$0xff]
      %v808 = vld [vmem:[%s1 + $0x98] sm:$0xff]
      %v809 = vld [vmem:[%s1 + $0xa0] sm:$0xff]
      %v810 = vld [vmem:[%s1 + $0xa8] sm:$0xff]
      %v811 = vld [vmem:[%s1 + $0xb0] sm:$0xff]
      %v812 = vld [vmem:[%s1 + $0xb8] sm:$0xff]
      %v813 = vld [vmem:[%s2] sm:$0x1]
      %v815 = vperm.slane %v813, 0
      %818 = vst [vmem:[#allocation1] ss:$2 sm:$0xff] %v788
      %v819 = vld.sshfl [vmem:[#allocation1] sm:$0xff pattern:$0x75316420]
      %v820 = vld.sshfl [vmem:[#allocation1 + $0x8] sm:$0xff pattern:$0x75316420]
      %vm822 = vcmask 523264
      %v823 = vsel %vm822, %v820, 0
      %825 = vmatpush.msra.mxu0 %v804
      %826 = vmatpush.msra.mxu0 %v803
      %827 = vmatpush.msra.mxu0 %v802
      %828 = vmatpush.msra.mxu0 %v801
      %829 = vmatpush.msra.mxu0 %v800
      %830 = vmatpush.msra.mxu0 %v799
      %831 = vmatpush.msra.mxu0 %v798
      %832 = vmatpush.msra.mxu0 %v797
      %833 = vmatpush.msra.mxu0 %v796
      %834 = vmatpush.msra.mxu0 %v795
      %835 = vmatpush.msra.mxu0 %v794
      %836 = vmatpush.msra.mxu0 %v793
      %837 = vmatpush.msra.mxu0 %v792
      %838 = vmatpush.msra.mxu0 %v791
      %839 = vmatpush.msra.mxu0 %v790
      %840 = vmatpush.msra.mxu0 %v789
      %841 = vmatmul.f32.gmra.mxu0 %v819
      %v842 = vpop.f32.mrf.mxu0
      %v843 = vadd.f32 %v815, %v842
      %844 = vdwg.mxu0
      %845 = vmatpush.msra.mxu0 0.0
      %846 = vmatpush.msra.mxu0 0.0
      %847 = vmatpush.msra.mxu0 0.0
      %848 = vmatpush.msra.mxu0 0.0
      %849 = vmatpush.msra.mxu0 0.0
      %850 = vmatpush.msra.mxu0 0.0
      %851 = vmatpush.msra.mxu0 0.0
      %852 = vmatpush.msra.mxu0 0.0
      %853 = vmatpush.msra.mxu0 %v812
      %854 = vmatpush.msra.mxu0 %v811
      %855 = vmatpush.msra.mxu0 %v810
      %856 = vmatpush.msra.mxu0 %v809
      %857 = vmatpush.msra.mxu0 %v808
      %858 = vmatpush.msra.mxu0 %v807
      %859 = vmatpush.msra.mxu0 %v806
      %860 = vmatpush.msra.mxu0 %v805
      %861 = vmatmul.f32.gmra.mxu0 %v823
      %v862 = vpop.f32.mrf.mxu0
      %v863 = vadd.f32 %v843, %v862
      %864 = vdwg.mxu0
      %v865 = vld [vmem:[%s3] sm:$0x1]
      %v867 = vrot.slane %v863, 7
      %vm869 = vcmask 1040384
      %v870 = vsel %vm869, %v865, %v867
      %v871 = vld [vmem:[%s4] sm:$0x1f]
      %v872 = vadd.f32 %v870, %v871
      %v873 = vld [vmem:[%s5] sm:$0x1]
      %v874 = vld [vmem:[%s6] sm:$0x1]
      %vm875 = vcmask 258048
      %v876 = vsel %vm875, %v872, 0.0
      %877 = vadd.xlane.f32.xlu0 %v876
      %v878 = vpop.xlane.xlu0 %877
      %v879 = vrcp.pop 32.0
      %v880 = vmul.f32 32.0, %v879
      %v881 = vsub.f32 1.0, %v880
      %v882 = vmul.f32 %v879, %v881
      %v883 = vadd.f32 %v879, %v882
      %vm884 = vweird.f32 %v879
      %v885 = vsel %vm884, %v879, %v883
      %v886 = vmul.f32 %v878, %v885
      %v887 = vsub.f32 %v872, %v886
      %v888 = vmul.f32 %v887, %v887
      %v889 = vsel %vm875, %v888, 0.0
      %890 = vadd.xlane.f32.xlu0 %v889
      %v891 = vpop.xlane.xlu0 %890
      %v892 = vmul.f32 %v891, %v885
      %v893 = vadd.f32 %v892, 1e-05
      %v894 = vrsqrt.pop %v893
      %v895 = vmul.f32 %v894, %v893
      %v896 = vmul.f32 %v895, %v894
      %v897 = vmul.f32 0.5, %v896
      %v898 = vsub.f32 1.5, %v897
      %v899 = vmul.f32 %v894, %v898
      %vm900 = vweird.f32 %v893
      %vm901 = vweird.f32 %v894
      %vm902 = vmor %vm900, %vm901
      %v903 = vsel %vm902, %v894, %v899
      %v904 = vmul.f32 %v887, %v903
      %v906 = vperm.slane %v873, 0
      %v908 = vmul.f32 %v904, %v906
      %v910 = vperm.slane %v874, 0
      %v912 = vadd.f32 %v908, %v910
      loop: start=0, step=1, limit=2
      $region125: #{_lambda_.1} parent=123 // loop_pre_header
        _
      $region126: #{_lambda_.1} parent=123 // loop_header
        %s914 = sphi 0, %s918
        %p915 = scmp.ge.s32.totalorder %s914, 2
        %v919 = vphi %v912, %v1447
      $region127: #{_lambda_.1} parent=123 // loop_header_branch
        %917 = sbr.rel (%p915) target = $region131
      $region128: #{_lambda_.1} parent=123 // loop_body
        %s920 = scalar_lea.vmem %s7, %s914
        %v921 = vld [vmem:[%s920] sm:$0x1]
        %s922 = scalar_lea.vmem %s8, %s914
        %v923 = vld [vmem:[%s922] sm:$0x1]
        %v924 = vsel %vm875, %v919, 0.0
        %925 = vadd.xlane.f32.xlu0 %v924
        %v926 = vpop.xlane.xlu0 %925
        %v927 = vmul.f32 %v926, %v885
        %v928 = vsub.f32 %v919, %v927
        %v929 = vmul.f32 %v928, %v928
        %v930 = vsel %vm875, %v929, 0.0
        %931 = vadd.xlane.f32.xlu0 %v930
        %v932 = vpop.xlane.xlu0 %931
        %v933 = vmul.f32 %v932, %v885
        %v934 = vadd.f32 %v933, 1e-05
        %v935 = vrsqrt.pop %v934
        %v936 = vmul.f32 %v935, %v934
        %v937 = vmul.f32 %v936, %v935
        %v938 = vmul.f32 0.5, %v937
        %v939 = vsub.f32 1.5, %v938
        %v940 = vmul.f32 %v935, %v939
        %vm941 = vweird.f32 %v934
        %vm942 = vweird.f32 %v935
        %vm943 = vmor %vm941, %vm942
        %v944 = vsel %vm943, %v935, %v940
        %v945 = vmul.f32 %v928, %v944
        %v947 = vperm.slane %v921, 0
        %v949 = vmul.f32 %v945, %v947
        %v951 = vperm.slane %v923, 0
        %v953 = vadd.f32 %v949, %v951
        %s954 = smul.u32 %s914, 64
        %s955 = scalar_lea.vmem %s9, %s954
        %v956 = vld [vmem:[%s955] sm:$0xff]
        %v957 = vld [vmem:[%s955 + $0x8] sm:$0xff]
        %v958 = vld [vmem:[%s955 + $0x10] sm:$0xff]
        %v959 = vld [vmem:[%s955 + $0x18] sm:$0xff]
        %v960 = vld [vmem:[%s955 + $0x20] sm:$0xff]
        %v961 = vld [vmem:[%s955 + $0x28] sm:$0xff]
        %v962 = vld [vmem:[%s955 + $0x30] sm:$0xff]
        %v963 = vld [vmem:[%s955 + $0x38] sm:$0xff]
        %s964 = smul.u32 %s914, 2
        %s965 = scalar_lea.vmem %s10, %s964
        %v966 = vld [vmem:[%s965] sm:$0x1]
        %v967 = vld [vmem:[%s965 + $0x1] sm:$0x1]
        %v970 = vperm.slane %v966, 0
        %v971 = vperm.slane %v967, 0
        %vm974 = vcmask 261120
        %v976 = vsel %vm974, %v953, 0
        %978 = vmatpush.msra.mxu0 0.0
        %979 = vmatpush.msra.mxu0 0.0
        %980 = vmatpush.msra.mxu0 0.0
        %981 = vmatpush.msra.mxu0 0.0
        %982 = vmatpush.msra.mxu0 0.0
        %983 = vmatpush.msra.mxu0 0.0
        %984 = vmatpush.msra.mxu0 0.0
        %985 = vmatpush.msra.mxu0 0.0
        %986 = vmatpush.msra.mxu0 0.0
        %987 = vmatpush.msra.mxu0 0.0
        %988 = vmatpush.msra.mxu0 0.0
        %989 = vmatpush.msra.mxu0 0.0
        %990 = vmatpush.msra.mxu0 %v959
        %991 = vmatpush.msra.mxu0 %v958
        %992 = vmatpush.msra.mxu0 %v957
        %993 = vmatpush.msra.mxu0 %v956
        %994 = vmatmul.f32.gmra.mxu0 %v976
        %v995 = vpop.f32.mrf.mxu0
        %v996 = vadd.f32 %v970, %v995
        %997 = vdwg.mxu0
        %998 = vmatpush.msra.mxu0 0.0
        %999 = vmatpush.msra.mxu0 0.0
        %1000 = vmatpush.msra.mxu0 0.0
        %1001 = vmatpush.msra.mxu0 0.0
        %1002 = vmatpush.msra.mxu0 0.0
        %1003 = vmatpush.msra.mxu0 0.0
        %1004 = vmatpush.msra.mxu0 0.0
        %1005 = vmatpush.msra.mxu0 0.0
        %1006 = vmatpush.msra.mxu0 0.0
        %1007 = vmatpush.msra.mxu0 0.0
        %1008 = vmatpush.msra.mxu0 0.0
        %1009 = vmatpush.msra.mxu0 0.0
        %1010 = vmatpush.msra.mxu0 %v963
        %1011 = vmatpush.msra.mxu0 %v962
        %1012 = vmatpush.msra.mxu0 %v961
        %1013 = vmatpush.msra.mxu0 %v960
        %1014 = vmatmul.f32.gmra.mxu0 %v976
        %v1015 = vpop.f32.mrf.mxu0
        %v1016 = vadd.f32 %v971, %v1015
        %1017 = vdwg.mxu0
        %s1018 = scalar_lea.vmem %s11, %s954
        %v1019 = vld [vmem:[%s1018] sm:$0xff]
        %v1020 = vld [vmem:[%s1018 + $0x8] sm:$0xff]
        %v1021 = vld [vmem:[%s1018 + $0x10] sm:$0xff]
        %v1022 = vld [vmem:[%s1018 + $0x18] sm:$0xff]
        %v1023 = vld [vmem:[%s1018 + $0x20] sm:$0xff]
        %v1024 = vld [vmem:[%s1018 + $0x28] sm:$0xff]
        %v1025 = vld [vmem:[%s1018 + $0x30] sm:$0xff]
        %v1026 = vld [vmem:[%s1018 + $0x38] sm:$0xff]
        %s1027 = scalar_lea.vmem %s12, %s964
        %v1028 = vld [vmem:[%s1027] sm:$0x1]
        %v1029 = vld [vmem:[%s1027 + $0x1] sm:$0x1]
        %v1032 = vperm.slane %v1028, 0
        %v1033 = vperm.slane %v1029, 0
        %1036 = vmatpush.msra.mxu0 0.0
        %1037 = vmatpush.msra.mxu0 0.0
        %1038 = vmatpush.msra.mxu0 0.0
        %1039 = vmatpush.msra.mxu0 0.0
        %1040 = vmatpush.msra.mxu0 0.0
        %1041 = vmatpush.msra.mxu0 0.0
        %1042 = vmatpush.msra.mxu0 0.0
        %1043 = vmatpush.msra.mxu0 0.0
        %1044 = vmatpush.msra.mxu0 0.0
        %1045 = vmatpush.msra.mxu0 0.0
        %1046 = vmatpush.msra.mxu0 0.0
        %1047 = vmatpush.msra.mxu0 0.0
        %1048 = vmatpush.msra.mxu0 %v1022
        %1049 = vmatpush.msra.mxu0 %v1021
        %1050 = vmatpush.msra.mxu0 %v1020
        %1051 = vmatpush.msra.mxu0 %v1019
        %1052 = vmatmul.f32.gmra.mxu0 %v976
        %v1053 = vpop.f32.mrf.mxu0
        %v1054 = vadd.f32 %v1032, %v1053
        %1055 = vdwg.mxu0
        %1056 = vmatpush.msra.mxu0 0.0
        %1057 = vmatpush.msra.mxu0 0.0
        %1058 = vmatpush.msra.mxu0 0.0
        %1059 = vmatpush.msra.mxu0 0.0
        %1060 = vmatpush.msra.mxu0 0.0
        %1061 = vmatpush.msra.mxu0 0.0
        %1062 = vmatpush.msra.mxu0 0.0
        %1063 = vmatpush.msra.mxu0 0.0
        %1064 = vmatpush.msra.mxu0 0.0
        %1065 = vmatpush.msra.mxu0 0.0
        %1066 = vmatpush.msra.mxu0 0.0
        %1067 = vmatpush.msra.mxu0 0.0
        %1068 = vmatpush.msra.mxu0 %v1026
        %1069 = vmatpush.msra.mxu0 %v1025
        %1070 = vmatpush.msra.mxu0 %v1024
        %1071 = vmatpush.msra.mxu0 %v1023
        %1072 = vmatmul.f32.gmra.mxu0 %v976
        %v1073 = vpop.f32.mrf.mxu0
        %v1074 = vadd.f32 %v1033, %v1073
        %1075 = vdwg.mxu0
        %s1076 = scalar_lea.vmem %s13, %s954
        %v1077 = vld [vmem:[%s1076] sm:$0xff]
        %v1078 = vld [vmem:[%s1076 + $0x8] sm:$0xff]
        %v1079 = vld [vmem:[%s1076 + $0x10] sm:$0xff]
        %v1080 = vld [vmem:[%s1076 + $0x18] sm:$0xff]
        %v1081 = vld [vmem:[%s1076 + $0x20] sm:$0xff]
        %v1082 = vld [vmem:[%s1076 + $0x28] sm:$0xff]
        %v1083 = vld [vmem:[%s1076 + $0x30] sm:$0xff]
        %v1084 = vld [vmem:[%s1076 + $0x38] sm:$0xff]
        %s1085 = scalar_lea.vmem %s14, %s964
        %v1086 = vld [vmem:[%s1085] sm:$0x1]
        %v1087 = vld [vmem:[%s1085 + $0x1] sm:$0x1]
        %v1090 = vperm.slane %v1086, 0
        %v1091 = vperm.slane %v1087, 0
        %1094 = vmatpush.msra.mxu0 0.0
        %1095 = vmatpush.msra.mxu0 0.0
        %1096 = vmatpush.msra.mxu0 0.0
        %1097 = vmatpush.msra.mxu0 0.0
        %1098 = vmatpush.msra.mxu0 0.0
        %1099 = vmatpush.msra.mxu0 0.0
        %1100 = vmatpush.msra.mxu0 0.0
        %1101 = vmatpush.msra.mxu0 0.0
        %1102 = vmatpush.msra.mxu0 0.0
        %1103 = vmatpush.msra.mxu0 0.0
        %1104 = vmatpush.msra.mxu0 0.0
        %1105 = vmatpush.msra.mxu0 0.0
        %1106 = vmatpush.msra.mxu0 %v1080
        %1107 = vmatpush.msra.mxu0 %v1079
        %1108 = vmatpush.msra.mxu0 %v1078
        %1109 = vmatpush.msra.mxu0 %v1077
        %1110 = vmatmul.f32.gmra.mxu0 %v976
        %v1111 = vpop.f32.mrf.mxu0
        %v1112 = vadd.f32 %v1090, %v1111
        %1113 = vdwg.mxu0
        %1114 = vmatpush.msra.mxu0 0.0
        %1115 = vmatpush.msra.mxu0 0.0
        %1116 = vmatpush.msra.mxu0 0.0
        %1117 = vmatpush.msra.mxu0 0.0
        %1118 = vmatpush.msra.mxu0 0.0
        %1119 = vmatpush.msra.mxu0 0.0
        %1120 = vmatpush.msra.mxu0 0.0
        %1121 = vmatpush.msra.mxu0 0.0
        %1122 = vmatpush.msra.mxu0 0.0
        %1123 = vmatpush.msra.mxu0 0.0
        %1124 = vmatpush.msra.mxu0 0.0
        %1125 = vmatpush.msra.mxu0 0.0
        %1126 = vmatpush.msra.mxu0 %v1084
        %1127 = vmatpush.msra.mxu0 %v1083
        %1128 = vmatpush.msra.mxu0 %v1082
        %1129 = vmatpush.msra.mxu0 %v1081
        %1130 = vmatmul.f32.gmra.mxu0 %v976
        %v1131 = vpop.f32.mrf.mxu0
        %v1132 = vadd.f32 %v1091, %v1131
        %1133 = vdwg.mxu0
        %v1134 = vmul.f32 %v996, 0.25
        %v1135 = vmul.f32 %v1016, 0.25
        %vm1136 = vcmask 130048
        %v1138 = vsel %vm1136, %v1134, 0
        %v1141 = vsel %vm1136, %v1054, 0
        %1143 = vmatpush.xpose.msra.mxu0 0.0
        %1144 = vmatpush.xpose.msra.mxu0 0.0
        %1145 = vmatpush.xpose.msra.mxu0 0.0
        %1146 = vmatpush.xpose.msra.mxu0 0.0
        %1147 = vmatpush.xpose.msra.mxu0 0.0
        %1148 = vmatpush.xpose.msra.mxu0 0.0
        %1149 = vmatpush.xpose.msra.mxu0 0.0
        %1150 = vmatpush.xpose.msra.mxu0 0.0
        %1151 = vmatpush.xpose.msra.mxu0 0.0
        %1152 = vmatpush.xpose.msra.mxu0 0.0
        %1153 = vmatpush.xpose.msra.mxu0 0.0
        %1154 = vmatpush.xpose.msra.mxu0 0.0
        %1155 = vmatpush.xpose.msra.mxu0 0.0
        %1156 = vmatpush.xpose.msra.mxu0 0.0
        %1157 = vmatpush.xpose.msra.mxu0 0.0
        %1158 = vmatpush.xpose.msra.mxu0 %v1141
        %1159 = vmatmul.f32.gmra.mxu0 %v1138
        %v1160 = vpop.f32.mrf.mxu0
        %v1161 = vadd.f32 0.0, %v1160
        %1162 = vdwg.mxu0
        %v1164 = vsel %vm1136, %v1135, 0
        %v1167 = vsel %vm1136, %v1074, 0
        %1169 = vmatpush.xpose.msra.mxu0 0.0
        %1170 = vmatpush.xpose.msra.mxu0 0.0
        %1171 = vmatpush.xpose.msra.mxu0 0.0
        %1172 = vmatpush.xpose.msra.mxu0 0.0
        %1173 = vmatpush.xpose.msra.mxu0 0.0
        %1174 = vmatpush.xpose.msra.mxu0 0.0
        %1175 = vmatpush.xpose.msra.mxu0 0.0
        %1176 = vmatpush.xpose.msra.mxu0 0.0
        %1177 = vmatpush.xpose.msra.mxu0 0.0
        %1178 = vmatpush.xpose.msra.mxu0 0.0
        %1179 = vmatpush.xpose.msra.mxu0 0.0
        %1180 = vmatpush.xpose.msra.mxu0 0.0
        %1181 = vmatpush.xpose.msra.mxu0 0.0
        %1182 = vmatpush.xpose.msra.mxu0 0.0
        %1183 = vmatpush.xpose.msra.mxu0 0.0
        %1184 = vmatpush.xpose.msra.mxu0 %v1167
        %1185 = vmatmul.f32.gmra.mxu0 %v1164
        %v1186 = vpop.f32.mrf.mxu0
        %v1187 = vadd.f32 0.0, %v1186
        %1188 = vdwg.mxu0
        %vm1189 = vcmask 36864
        %v1190 = vsel %vm1189, %v1161, -inf
        %1191 = vmax.xlane.f32.xlu0 %v1190
        %v1192 = vpop.xlane.xlu0 %1191
        %v1193 = vsel %vm1189, %v1187, -inf
        %1194 = vmax.xlane.f32.xlu0 %v1193
        %v1195 = vpop.xlane.xlu0 %1194
        %v1196 = vsub.f32 %v1161, %v1192
        %v1197 = vsub.f32 %v1187, %v1195
        %v1198 = vmul.f32 %v1196, 1.442695
        %v1199 = vpow.pop %v1198
        %v1200 = vmul.f32 %v1197, 1.442695
        %v1201 = vpow.pop %v1200
        %v1202 = vsel %vm1189, %v1199, 0.0
        %1203 = vadd.xlane.f32.xlu0 %v1202
        %v1204 = vpop.xlane.xlu0 %1203
        %v1205 = vsel %vm1189, %v1201, 0.0
        %1206 = vadd.xlane.f32.xlu0 %v1205
        %v1207 = vpop.xlane.xlu0 %1206
        %v1208 = vrcp.pop %v1204
        %v1209 = vrcp.pop %v1207
        %v1210 = vmul.f32 %v1199, %v1208
        %v1211 = vmul.f32 %v1201, %v1209
        %vm1212 = vcmask 39936
        %v1214 = vsel %vm1212, %v1210, 0
        %vm1216 = vcmask 1044480
        %v1218 = vsel %vm1216, %v1112, 0
        %1220 = vmatpush.msra.mxu0 0.0
        %1221 = vmatpush.msra.mxu0 0.0
        %1222 = vmatpush.msra.mxu0 0.0
        %1223 = vmatpush.msra.mxu0 0.0
        %1224 = vmatpush.msra.mxu0 0.0
        %1225 = vmatpush.msra.mxu0 0.0
        %1226 = vmatpush.msra.mxu0 0.0
        %1227 = vmatpush.msra.mxu0 0.0
        %1228 = vmatpush.msra.mxu0 0.0
        %1229 = vmatpush.msra.mxu0 0.0
        %1230 = vmatpush.msra.mxu0 0.0
        %1231 = vmatpush.msra.mxu0 0.0
        %1232 = vmatpush.msra.mxu0 0.0
        %1233 = vmatpush.msra.mxu0 0.0
        %1234 = vmatpush.msra.mxu0 0.0
        %1235 = vmatpush.msra.mxu0 %v1218
        %1236 = vmatmul.f32.gmra.mxu0 %v1214
        %v1237 = vpop.f32.mrf.mxu0
        %v1238 = vadd.f32 0.0, %v1237
        %1239 = vdwg.mxu0
        %v1241 = vsel %vm1212, %v1211, 0
        %v1244 = vsel %vm1216, %v1132, 0
        %1246 = vmatpush.msra.mxu0 0.0
        %1247 = vmatpush.msra.mxu0 0.0
        %1248 = vmatpush.msra.mxu0 0.0
        %1249 = vmatpush.msra.mxu0 0.0
        %1250 = vmatpush.msra.mxu0 0.0
        %1251 = vmatpush.msra.mxu0 0.0
        %1252 = vmatpush.msra.mxu0 0.0
        %1253 = vmatpush.msra.mxu0 0.0
        %1254 = vmatpush.msra.mxu0 0.0
        %1255 = vmatpush.msra.mxu0 0.0
        %1256 = vmatpush.msra.mxu0 0.0
        %1257 = vmatpush.msra.mxu0 0.0
        %1258 = vmatpush.msra.mxu0 0.0
        %1259 = vmatpush.msra.mxu0 0.0
        %1260 = vmatpush.msra.mxu0 0.0
        %1261 = vmatpush.msra.mxu0 %v1244
        %1262 = vmatmul.f32.gmra.mxu0 %v1241
        %v1263 = vpop.f32.mrf.mxu0
        %v1264 = vadd.f32 0.0, %v1263
        %1265 = vdwg.mxu0
        %s1266 = smul.u32 %s914, 32
        %s1267 = scalar_lea.vmem %s15, %s1266
        %v1268 = vld [vmem:[%s1267] sm:$0xff]
        %v1269 = vld [vmem:[%s1267 + $0x8] sm:$0xff]
        %v1270 = vld [vmem:[%s1267 + $0x10] sm:$0xff]
        %v1271 = vld [vmem:[%s1267 + $0x18] sm:$0xff]
        %v1273 = vsel %vm1136, %v1238, 0
        %1275 = vmatpush.msra.mxu0 0.0
        %1276 = vmatpush.msra.mxu0 0.0
        %1277 = vmatpush.msra.mxu0 0.0
        %1278 = vmatpush.msra.mxu0 0.0
        %1279 = vmatpush.msra.mxu0 0.0
        %1280 = vmatpush.msra.mxu0 0.0
        %1281 = vmatpush.msra.mxu0 0.0
        %1282 = vmatpush.msra.mxu0 0.0
        %1283 = vmatpush.msra.mxu0 0.0
        %1284 = vmatpush.msra.mxu0 0.0
        %1285 = vmatpush.msra.mxu0 0.0
        %1286 = vmatpush.msra.mxu0 0.0
        %1287 = vmatpush.msra.mxu0 0.0
        %1288 = vmatpush.msra.mxu0 0.0
        %1289 = vmatpush.msra.mxu0 %v1269
        %1290 = vmatpush.msra.mxu0 %v1268
        %1291 = vmatmul.f32.gmra.mxu0 %v1273
        %v1292 = vpop.f32.mrf.mxu0
        %v1293 = vadd.f32 0.0, %v1292
        %1294 = vdwg.mxu0
        %v1296 = vsel %vm1136, %v1264, 0
        %1298 = vmatpush.msra.mxu0 0.0
        %1299 = vmatpush.msra.mxu0 0.0
        %1300 = vmatpush.msra.mxu0 0.0
        %1301 = vmatpush.msra.mxu0 0.0
        %1302 = vmatpush.msra.mxu0 0.0
        %1303 = vmatpush.msra.mxu0 0.0
        %1304 = vmatpush.msra.mxu0 0.0
        %1305 = vmatpush.msra.mxu0 0.0
        %1306 = vmatpush.msra.mxu0 0.0
        %1307 = vmatpush.msra.mxu0 0.0
        %1308 = vmatpush.msra.mxu0 0.0
        %1309 = vmatpush.msra.mxu0 0.0
        %1310 = vmatpush.msra.mxu0 0.0
        %1311 = vmatpush.msra.mxu0 0.0
        %1312 = vmatpush.msra.mxu0 %v1271
        %1313 = vmatpush.msra.mxu0 %v1270
        %1314 = vmatmul.f32.gmra.mxu0 %v1296
        %v1315 = vpop.f32.mrf.mxu0
        %v1316 = vadd.f32 0.0, %v1315
        %1317 = vdwg.mxu0
        %v1318 = vsel %vm875, %v1293, 0.0
        %v1319 = vsel %vm875, %v1316, 0.0
        %v1320 = vadd.f32 %v1318, %v1319
        %s1321 = scalar_lea.vmem %s16, %s914
        %v1322 = vld [vmem:[%s1321] sm:$0x1]
        %v1324 = vperm.slane %v1322, 0
        %v1326 = vadd.f32 %v1320, %v1324
        %v1327 = vadd.f32 %v919, %v1326
        %s1328 = scalar_lea.vmem %s17, %s914
        %v1329 = vld [vmem:[%s1328] sm:$0x1]
        %s1330 = scalar_lea.vmem %s18, %s914
        %v1331 = vld [vmem:[%s1330] sm:$0x1]
        %v1332 = vsel %vm875, %v1327, 0.0
        %1333 = vadd.xlane.f32.xlu0 %v1332
        %v1334 = vpop.xlane.xlu0 %1333
        %v1335 = vmul.f32 %v1334, %v885
        %v1336 = vsub.f32 %v1327, %v1335
        %v1337 = vmul.f32 %v1336, %v1336
        %v1338 = vsel %vm875, %v1337, 0.0
        %1339 = vadd.xlane.f32.xlu0 %v1338
        %v1340 = vpop.xlane.xlu0 %1339
        %v1341 = vmul.f32 %v1340, %v885
        %v1342 = vadd.f32 %v1341, 1e-05
        %v1343 = vrsqrt.pop %v1342
        %v1344 = vmul.f32 %v1343, %v1342
        %v1345 = vmul.f32 %v1344, %v1343
        %v1346 = vmul.f32 0.5, %v1345
        %v1347 = vsub.f32 1.5, %v1346
        %v1348 = vmul.f32 %v1343, %v1347
        %vm1349 = vweird.f32 %v1342
        %vm1350 = vweird.f32 %v1343
        %vm1351 = vmor %vm1349, %vm1350
        %v1352 = vsel %vm1351, %v1343, %v1348
        %v1353 = vmul.f32 %v1336, %v1352
        %v1355 = vperm.slane %v1329, 0
        %v1357 = vmul.f32 %v1353, %v1355
        %v1359 = vperm.slane %v1331, 0
        %v1361 = vadd.f32 %v1357, %v1359
        %s1362 = scalar_lea.vmem %s19, %s1266
        %v1363 = vld [vmem:[%s1362] sm:$0xff]
        %v1364 = vld [vmem:[%s1362 + $0x8] sm:$0xff]
        %v1365 = vld [vmem:[%s1362 + $0x10] sm:$0xff]
        %v1366 = vld [vmem:[%s1362 + $0x18] sm:$0xff]
        %s1367 = scalar_lea.vmem %s20, %s914
        %v1368 = vld [vmem:[%s1367] sm:$0x1]
        %v1370 = vperm.slane %v1368, 0
        %v1373 = vsel %vm974, %v1361, 0
        %1375 = vmatpush.msra.mxu0 0.0
        %1376 = vmatpush.msra.mxu0 0.0
        %1377 = vmatpush.msra.mxu0 0.0
        %1378 = vmatpush.msra.mxu0 0.0
        %1379 = vmatpush.msra.mxu0 0.0
        %1380 = vmatpush.msra.mxu0 0.0
        %1381 = vmatpush.msra.mxu0 0.0
        %1382 = vmatpush.msra.mxu0 0.0
        %1383 = vmatpush.msra.mxu0 0.0
        %1384 = vmatpush.msra.mxu0 0.0
        %1385 = vmatpush.msra.mxu0 0.0
        %1386 = vmatpush.msra.mxu0 0.0
        %1387 = vmatpush.msra.mxu0 %v1366
        %1388 = vmatpush.msra.mxu0 %v1365
        %1389 = vmatpush.msra.mxu0 %v1364
        %1390 = vmatpush.msra.mxu0 %v1363
        %1391 = vmatmul.f32.gmra.mxu0 %v1373
        %v1392 = vpop.f32.mrf.mxu0
        %v1393 = vadd.f32 %v1370, %v1392
        %1394 = vdwg.mxu0
        %v1395 = vmul.f32 %v1393, 0.5
        %v1396 = vmul.f32 %v1393, 0.044715
        %v1397 = vmul.f32 %v1396, %v1393
        %v1398 = vmul.f32 %v1397, %v1393
        %v1399 = vadd.f32 %v1393, %v1398
        %v1400 = vmul.f32 %v1399, 0.7978846
        %v1401 = vtanh.pop %v1400
        %v1402 = vadd.f32 %v1401, 1.0
        %v1403 = vmul.f32 %v1395, %v1402
        %s1404 = smul.u32 %s914, 128
        %s1405 = scalar_lea.vmem %s21, %s1404
        %v1406 = vld [vmem:[%s1405] sm:$0xff]
        %v1407 = vld [vmem:[%s1405 + $0x8] sm:$0xff]
        %v1408 = vld [vmem:[%s1405 + $0x10] sm:$0xff]
        %v1409 = vld [vmem:[%s1405 + $0x18] sm:$0xff]
        %v1410 = vld [vmem:[%s1405 + $0x20] sm:$0xff]
        %v1411 = vld [vmem:[%s1405 + $0x28] sm:$0xff]
        %v1412 = vld [vmem:[%s1405 + $0x30] sm:$0xff]
        %v1413 = vld [vmem:[%s1405 + $0x38] sm:$0xff]
        %v1414 = vld [vmem:[%s1405 + $0x40] sm:$0xff]
        %v1415 = vld [vmem:[%s1405 + $0x48] sm:$0xff]
        %v1416 = vld [vmem:[%s1405 + $0x50] sm:$0xff]
        %v1417 = vld [vmem:[%s1405 + $0x58] sm:$0xff]
        %v1418 = vld [vmem:[%s1405 + $0x60] sm:$0xff]
        %v1419 = vld [vmem:[%s1405 + $0x68] sm:$0xff]
        %v1420 = vld [vmem:[%s1405 + $0x70] sm:$0xff]
        %v1421 = vld [vmem:[%s1405 + $0x78] sm:$0xff]
        %s1422 = scalar_lea.vmem %s22, %s914
        %v1423 = vld [vmem:[%s1422] sm:$0x1]
        %v1425 = vperm.slane %v1423, 0
        %1427 = vmatpush.msra.mxu0 %v1421
        %1428 = vmatpush.msra.mxu0 %v1420
        %1429 = vmatpush.msra.mxu0 %v1419
        %1430 = vmatpush.msra.mxu0 %v1418
        %1431 = vmatpush.msra.mxu0 %v1417
        %1432 = vmatpush.msra.mxu0 %v1416
        %1433 = vmatpush.msra.mxu0 %v1415
        %1434 = vmatpush.msra.mxu0 %v1414
        %1435 = vmatpush.msra.mxu0 %v1413
        %1436 = vmatpush.msra.mxu0 %v1412
        %1437 = vmatpush.msra.mxu0 %v1411
        %1438 = vmatpush.msra.mxu0 %v1410
        %1439 = vmatpush.msra.mxu0 %v1409
        %1440 = vmatpush.msra.mxu0 %v1408
        %1441 = vmatpush.msra.mxu0 %v1407
        %1442 = vmatpush.msra.mxu0 %v1406
        %1443 = vmatmul.f32.gmra.mxu0 %v1403
        %v1444 = vpop.f32.mrf.mxu0
        %v1445 = vadd.f32 %v1425, %v1444
        %1446 = vdwg.mxu0
        %v1447 = vadd.f32 %v1327, %v1445
      $region129: #{_lambda_.1} parent=123 // loop_footer
        %s918 = sadd.s32 1, %s914
      $region130: #{_lambda_.1} parent=123 // loop_footer_branch
        %913 = sbr.rel target = $region126
      $region131: #{_lambda_.1} parent=123 // loop_exit
        _
      %v1448 = vld [vmem:[%s23] sm:$0x1]
      %v1449 = vld [vmem:[%s24] sm:$0x1]
      %vm1450 = vcmask 253952
      %v1451 = vsel %vm1450, %v919, 0.0
      %1452 = vadd.xlane.f32.xlu0 %v1451
      %v1453 = vpop.xlane.xlu0 %1452
      %v1454 = vmul.f32 %v1453, %v885
      %v1455 = vsub.f32 %v919, %v1454
      %v1456 = vmul.f32 %v1455, %v1455
      %v1457 = vsel %vm1450, %v1456, 0.0
      %1458 = vadd.xlane.f32.xlu0 %v1457
      %v1459 = vpop.xlane.xlu0 %1458
      %v1460 = vmul.f32 %v1459, %v885
      %v1461 = vadd.f32 %v1460, 1e-05
      %v1462 = vrsqrt.pop %v1461
      %v1463 = vmul.f32 %v1462, %v1461
      %v1464 = vmul.f32 %v1463, %v1462
      %v1465 = vmul.f32 0.5, %v1464
      %v1466 = vsub.f32 1.5, %v1465
      %v1467 = vmul.f32 %v1462, %v1466
      %vm1468 = vweird.f32 %v1461
      %vm1469 = vweird.f32 %v1462
      %vm1470 = vmor %vm1468, %vm1469
      %v1471 = vsel %vm1470, %v1462, %v1467
      %v1472 = vmul.f32 %v1455, %v1471
      %v1473 = vmul.f32 %v1472, %v1448
      %v1474 = vadd.f32 %v1473, %v1449
      %v1475 = vld [vmem:[%s25] sm:$0xff]
      %v1476 = vld [vmem:[%s25 + $0x8] sm:$0xff]
      %v1477 = vld [vmem:[%s25 + $0x10] sm:$0xff]
      %v1478 = vld [vmem:[%s25 + $0x18] sm:$0xff]
      %vm1479 = vcmask 261120
      %v1481 = vsel %vm1479, %v1474, 0
      %1483 = vmatpush.msra.mxu0 0.0
      %1484 = vmatpush.msra.mxu0 0.0
      %1485 = vmatpush.msra.mxu0 0.0
      %1486 = vmatpush.msra.mxu0 0.0
      %1487 = vmatpush.msra.mxu0 0.0
      %1488 = vmatpush.msra.mxu0 0.0
      %1489 = vmatpush.msra.mxu0 0.0
      %1490 = vmatpush.msra.mxu0 0.0
      %1491 = vmatpush.msra.mxu0 0.0
      %1492 = vmatpush.msra.mxu0 0.0
      %1493 = vmatpush.msra.mxu0 0.0
      %1494 = vmatpush.msra.mxu0 0.0
      %1495 = vmatpush.msra.mxu0 %v1478
      %1496 = vmatpush.msra.mxu0 %v1477
      %1497 = vmatpush.msra.mxu0 %v1476
      %1498 = vmatpush.msra.mxu0 %v1475
      %1499 = vmatmul.f32.gmra.mxu0 %v1481
      %v1500 = vpop.f32.mrf.mxu0
      %v1501 = vadd.f32 0.0, %v1500
      %1502 = vdwg.mxu0
      %vm1503 = vcmask 122880
      %1504 = vst.msk [vmem:[%s787] sm:$0x1] %vm1503, %v1501
      %p1505 = scmp.lt.s32.totalorder %s37, 3
      %s1506 = scalar_select %p1505, %s37, 3
      %s1507 = scalar_lea.vmem %s26, %s1506
      // Predicated region
      $region132: #{_lambda_.1} parent=123 // pred_check
        %p1508 = pneg %p606
      $region133: #{_lambda_.1} parent=123 // pred_check_branch
        %1510 = sbr.rel (%p1508) target = $region135
      $region134: #{_lambda_.1} parent=123 // pred_region
        _
      $region135: #{_lambda_.1} parent=123 // pred_fallthru
        _
    $region124: #{_lambda_.1} parent=5 // pred_fallthru
      _
    %p1511 = scmp.le.s32.totalorder 2, %s32
    // Predicated region
    $region136: #{_lambda_.1} parent=5 // pred_check
      %p1512 = pneg %p1511
    $region137: #{_lambda_.1} parent=5 // pred_check_branch
      %1514 = sbr.rel (%p1512) target = $region139
    $region138: #{_lambda_.1} parent=5 // pred_region
      %s1515 = ssub.s32 %s32, 2
      // Predicated region
      $region140: #{_lambda_.1} parent=138 // pred_check
        %p1516 = pneg %p612
      $region141: #{_lambda_.1} parent=138 // pred_check_branch
        %1518 = sbr.rel (%p1516) target = $region143
      $region142: #{_lambda_.1} parent=138 // pred_region
        %p1519 = scmp.lt.s32.totalorder %s38, 3
        %s1520 = scalar_select %p1519, %s38, 3
        %s1521 = scalar_lea.vmem %s26, %s1520
      $region143: #{_lambda_.1} parent=138 // pred_fallthru
        _
    $region139: #{_lambda_.1} parent=5 // pred_fallthru
      _
  $region6: #{_lambda_.1} parent=0 // loop_footer
    %s36 = sadd.s32 1, %s32
  $region7: #{_lambda_.1} parent=0 // loop_footer_branch
    %31 = sbr.rel target = $region3
  $region8: #{_lambda_.1} parent=0 // loop_exit
    _

</llo_original>
